<compile_context>
chip_gen: v7x
topology: tpu7x:2x2x1
jax: 0.10.0
libtpu: 0.0.40
codegen_flags: <defaults>
</compile_context>

<pallas_src>
import functools

import numpy as np

import jax
import jax.numpy as jnp
from jax.experimental import pallas as pl
from jax.experimental.pallas import tpu as pltpu

LANES = 128          # points per output row / per kernel lane row
PAIR_LANES = 2 * LANES   # 256 interleaved (theta, phi) values per input row
TILE_R = 1024        # rows per grid step (~1 MiB f32 input block)


def _make_selection_matrix():
    """(256, 256) permutation: row_vec @ S -> [theta_0..theta_127 | phi_0..phi_127]."""
    j = np.arange(PAIR_LANES)
    src = np.where(j < LANES, 2 * j, 2 * (j - LANES) + 1)
    s = np.zeros((PAIR_LANES, PAIR_LANES), np.float32)
    s[src, j] = 1.0
    return s


_SEL = _make_selection_matrix()


def _sphere_kernel(sel_ref, x_ref, out_ref, *, radius):
    # x_ref: (T, 256) interleaved [theta, phi] pairs (128 points per row).
    # sel_ref: (256, 256) f32 permutation matrix (resident in VMEM).
    # out_ref: (3, T, 128) channel-major planes (x, y, z).
    data = x_ref[...].astype(jnp.float32)

    # De-interleave on the idle MXU: result row = [theta_0..theta_127 | phi_0..phi_127].
    # HIGHEST precision so f32 values pass through the permutation exactly.
    deint = jnp.dot(
        data,
        sel_ref[...],
        preferred_element_type=jnp.float32,
        precision=jax.lax.Precision.HIGHEST,
    )
    theta = deint[:, :LANES]
    phi = deint[:, LANES:]

    cos_t = jnp.cos(theta)
    sin_t = jnp.sin(theta)
    sin_p = jnp.sin(phi)

    # radius is a compile-time Python float: skip the multiply when it is 1.0.
    if radius == 1.0:
        r_sin_p = sin_p
        z = cos_t
    else:
        r_sin_p = radius * sin_p
        z = radius * cos_t

    od = out_ref.dtype
    out_ref[0] = (cos_t * r_sin_p).astype(od)   # x = r*cos(theta)*sin(phi)
    out_ref[1] = (sin_t * r_sin_p).astype(od)   # y = r*sin(theta)*sin(phi)
    # NOTE: matches the torch reference exactly: z = r*cos(X[..., 0]).
    out_ref[2] = z.astype(od)


def _dimension_semantics():
    """CORE_PARALLEL on v7x (2 TensorCores/chip), plain 'parallel' elsewhere."""
    try:
        kind = jax.devices()[0].device_kind.lower()
    except Exception:  # pragma: no cover - defensive
        kind = ""
    if "v7" in kind or "tpu7" in kind or "7x" in kind:
        return (getattr(pltpu, "CORE_PARALLEL", "parallel"),)
    return ("parallel",)


@functools.partial(jax.jit, static_argnames=("radius",))
def sphere_forward(X, radius=1.0):
    """JAX/Pallas equivalent of Sphere.forward: X[..., 2] -> [..., 3]."""
    assert X.shape[-1] == 2
    lead = X.shape[:-1]
    dtype = X.dtype
    n = int(np.prod(lead, dtype=np.int64)) if lead else 1  # number of points

    if n == 0:
        return jnp.zeros(lead + (3,), dtype)

    flat = X.reshape(-1)                 # (2n,) interleaved pairs (free view)
    n_main = (n // LANES) * LANES        # points handled by the kernel
    r = n_main // LANES                  # rows of the (r, 256) kernel view

    pieces = []

    if r > 0:
        # Zero-copy when 2n is 256-aligned; otherwise a prefix slice (ragged path).
        xin = flat[: 2 * n_main].reshape(r, PAIR_LANES)
        tile_r = r if r <= TILE_R else TILE_R
        grid = (pl.cdiv(r, tile_r),)
        sel = jnp.asarray(_SEL)

        itemsize = jnp.dtype(dtype).itemsize
        cost = pl.CostEstimate(
            flops=int(n_main) * (8 * LANES + 8),      # selection matmul + elementwise
            transcendentals=3 * int(n_main),           # cos(t), sin(t), sin(p)
            bytes_accessed=int(5 * n_main * itemsize) + int(_SEL.nbytes),
        )

        planes = pl.pallas_call(
            functools.partial(_sphere_kernel, radius=float(radius)),
            out_shape=jax.ShapeDtypeStruct((3, r, LANES), dtype),
            grid=grid,
            in_specs=[
                # Selection matrix: same block every step -> fetched once, stays in VMEM.
                pl.BlockSpec((PAIR_LANES, PAIR_LANES), lambda i: (0, 0)),
                # Interleaved (theta, phi) pairs, lane-dense rows of 256 values.
                pl.BlockSpec((tile_r, PAIR_LANES), lambda i: (i, 0)),
            ],
            # Single merged channel-major output -> one writeback DMA per step.
            out_specs=pl.BlockSpec((3, tile_r, LANES), lambda i: (0, i, 0)),
            compiler_params=pltpu.CompilerParams(
                dimension_semantics=_dimension_semantics(),
            ),
            cost_estimate=cost,
        )(sel, xin)

        # (3, n_main) channel-major -> (n_main, 3) point-major: one fused pass.
        pieces.append(jnp.transpose(planes.reshape(3, n_main), (1, 0)))

    if n_main < n:
        # <=127-point ragged tail: trivial jnp path (avoids full-array pad/slice).
        tail = flat[2 * n_main:].reshape(-1, 2)
        th = tail[:, 0]
        ph = tail[:, 1]
        tx = radius * jnp.cos(th) * jnp.sin(ph)
        ty = radius * jnp.sin(th) * jnp.sin(ph)
        tz = radius * jnp.cos(th)
        pieces.append(jnp.stack([tx, ty, tz], axis=-1).astype(dtype))

    out_flat = pieces[0] if len(pieces) == 1 else jnp.concatenate(pieces, axis=0)
    return out_flat.reshape(lead + (3,))


def sphere_reference(X, radius=1.0):
    x = radius * jnp.cos(X[..., 0]) * jnp.sin(X[..., 1])
    y = radius * jnp.sin(X[..., 0]) * jnp.sin(X[..., 1])
    z = radius * jnp.cos(X[..., 0])
    return jnp.stack([x, y, z], axis=-1)


if __name__ == "__main__":
    key = jax.random.PRNGKey(0)

    # Case 1: 128 points (lane-aligned) -> pure zero-copy kernel path.
    X1 = jax.random.uniform(
        key, (2, 4, 16, 2), dtype=jnp.float32, minval=-3.0, maxval=3.0
    )
    out1 = jax.block_until_ready(sphere_forward(X1, radius=1.0))
    ref1 = sphere_reference(X1, radius=1.0)
    assert out1.shape == X1.shape[:-1] + (3,)
    assert jnp.allclose(out1, ref1, atol=2e-5, rtol=2e-5)

    # Case 2: ragged point count (3000) + non-unit radius -> kernel main part + jnp tail.
    X2 = jax.random.uniform(
        jax.random.PRNGKey(1), (3, 1000, 2), dtype=jnp.float32, minval=-3.0, maxval=3.0
    )
    out2 = jax.block_until_ready(sphere_forward(X2, radius=2.5))
    ref2 = sphere_reference(X2, radius=2.5)
    assert out2.shape == X2.shape[:-1] + (3,)
    assert jnp.allclose(out2, ref2, atol=1e-4, rtol=1e-4)

    print("KERNEL_OK")
</pallas_src>

<mosaic_0001>
module attributes {stable_mosaic.version = 11 : i64} {
  func.func @_sphere_kernel(%arg0: i32, %arg1: memref<256x256xf32, #tpu.memory_space<vmem>>, %arg2: memref<1x256xf32, #tpu.memory_space<vmem>>, %arg3: memref<3x1x128xf32, #tpu.memory_space<vmem>>) attributes {dimension_semantics = [#tpu.dimension_semantics<parallel>], iteration_bounds = array<i64: 1>, scalar_prefetch = 0 : i64, scratch_operands = 0 : i64, tpu.core_type = #tpu.core_type<tc>, window_params = [{pipeline_mode = #tpu.pipeline_mode<synchronous>, transform_indices = @transform_0, window_bounds = array<i64: 256, 256>}, {transform_indices = @transform_1, window_bounds = array<i64: 1, 256>}, {transform_indices = @transform_2, window_bounds = array<i64: 3, 1, 128>}]} {
    %c0 = arith.constant 0 : index
    %c0_0 = arith.constant 0 : index
    %0 = vector.load %arg2[%c0, %c0_0] : memref<1x256xf32, #tpu.memory_space<vmem>>, vector<1x256xf32>
    %c0_1 = arith.constant 0 : index
    %c0_2 = arith.constant 0 : index
    %1 = vector.load %arg1[%c0_1, %c0_2] : memref<256x256xf32, #tpu.memory_space<vmem>>, vector<256x256xf32>
    %cst = arith.constant dense<0.000000e+00> : vector<1x256xf32>
    %2 = tpu.matmul %0, %1, %cst {dimension_numbers = #tpu.dot_dimension_numbers<[1], [0], [0], [1], [0, 0, 1, 1], [], []>, precision = #tpu.contract_precision<fp32>} : vector<1x256xf32>, vector<256x256xf32>, vector<1x256xf32> -> vector<1x256xf32>
    %3 = vector.extract_strided_slice %2 {offsets = [0, 0], sizes = [1, 128], strides = [1, 1]} : vector<1x256xf32> to vector<1x128xf32>
    %4 = vector.extract_strided_slice %2 {offsets = [0, 128], sizes = [1, 128], strides = [1, 1]} : vector<1x256xf32> to vector<1x128xf32>
    %5 = math.cos %3 : vector<1x128xf32>
    %6 = math.sin %3 : vector<1x128xf32>
    %7 = math.sin %4 : vector<1x128xf32>
    %8 = arith.mulf %5, %7 : vector<1x128xf32>
    %c0_3 = arith.constant 0 : index
    %c0_4 = arith.constant 0 : index
    %c0_5 = arith.constant 0 : index
    %9 = vector.load %arg3[%c0_3, %c0_4, %c0_5] : memref<3x1x128xf32, #tpu.memory_space<vmem>>, vector<1x1x128xf32>
    %10 = vector.shape_cast %9 : vector<1x1x128xf32> to vector<1x128xf32>
    %11 = vector.shape_cast %8 : vector<1x128xf32> to vector<1x1x128xf32>
    tpu.vector_store %arg3[%c0_3, %c0_4, %c0_5], %11 {strides = array<i32>} : memref<3x1x128xf32, #tpu.memory_space<vmem>>, vector<1x1x128xf32>,
    %12 = arith.mulf %6, %7 : vector<1x128xf32>
    %c1 = arith.constant 1 : index
    %c0_6 = arith.constant 0 : index
    %c0_7 = arith.constant 0 : index
    %13 = vector.load %arg3[%c1, %c0_6, %c0_7] : memref<3x1x128xf32, #tpu.memory_space<vmem>>, vector<1x1x128xf32>
    %14 = vector.shape_cast %13 : vector<1x1x128xf32> to vector<1x128xf32>
    %15 = vector.shape_cast %12 : vector<1x128xf32> to vector<1x1x128xf32>
    tpu.vector_store %arg3[%c1, %c0_6, %c0_7], %15 {strides = array<i32>} : memref<3x1x128xf32, #tpu.memory_space<vmem>>, vector<1x1x128xf32>,
    %c2 = arith.constant 2 : index
    %c0_8 = arith.constant 0 : index
    %c0_9 = arith.constant 0 : index
    %16 = vector.load %arg3[%c2, %c0_8, %c0_9] : memref<3x1x128xf32, #tpu.memory_space<vmem>>, vector<1x1x128xf32>
    %17 = vector.shape_cast %16 : vector<1x1x128xf32> to vector<1x128xf32>
    %18 = vector.shape_cast %5 : vector<1x128xf32> to vector<1x1x128xf32>
    tpu.vector_store %arg3[%c2, %c0_8, %c0_9], %18 {strides = array<i32>} : memref<3x1x128xf32, #tpu.memory_space<vmem>>, vector<1x1x128xf32>,
    return
  }
  func.func @transform_0(%arg0: i32) -> (i32, i32) {
    %c0_i32 = arith.constant 0 : i32
    %c0_i32_0 = arith.constant 0 : i32
    %c0_i32_1 = arith.constant 0 : i32
    return %c0_i32, %c0_i32_0 : i32, i32
  }
  func.func @transform_1(%arg0: i32) -> (i32, i32) {
    %c0_i32 = arith.constant 0 : i32
    %c0_i32_0 = arith.constant 0 : i32
    return %arg0, %c0_i32 : i32, i32
  }
  func.func @transform_2(%arg0: i32) -> (i32, i32, i32) {
    %c0_i32 = arith.constant 0 : i32
    %c0_i32_0 = arith.constant 0 : i32
    %c0_i32_1 = arith.constant 0 : i32
    return %c0_i32, %arg0, %c0_i32_0 : i32, i32, i32
  }
}

</mosaic_0001>

<llo_original>
// kernel: sphere_forward.1
$region0: #{sphere_forward.1}
  #allocation0 [shape = 'u32[]', space=smem, size = 0x4, offset = 0x4, fixed_abs, tag = 'smem constant byte address 0x4 - core index']
  #allocation1 [shape = 'u32[144,128]{1,0:T(1,128)}', space=vmem, size = 0x12000, scoped, tag = 'internal scratch']
  %s0 = inlined_call_operand.hbm [shape: f32[256,256], index: 0, kind: input, shape index: {}]
  %s1 = inlined_call_operand.vmem [shape: f32[1,256], index: 1, kind: input, shape index: {}]
  %s2 = inlined_call_operand.vmem [shape: f32[3,1,128], index: 2, kind: output, shape index: {}]
  %s3 = sld [smem:[#allocation0]]
  $region22: #{sphere_forward.1} parent=0
    _
  %s5 = ssub.s32 1, %s3
  %s6 = scalar_select 0, %s5, %s3
  $region1: #{sphere_forward.1} parent=0
    #allocation2 [shape = 'u8[262144]{0}', space=vmem, size = 0x40000, scoped, tag = 'input window, operand 0, single buffered']
    #allocation3 [shape = 's32[1]{0}', space=sflag, size = 0x4, scoped, tag = 'scoped memory for sphere_forward.1']
    %7 = vsyncpa [#allocation3], 0
    // Predicated region
    $region2: #{sphere_forward.1} parent=1 // pred_check
      _
    $region3: #{sphere_forward.1} parent=1 // pred_check_branch
      %9 = sbr.rel (0) target = $region5
    $region4: #{sphere_forward.1} parent=1 // pred_region
      %s11 = ssub.s32 8192, 8192
      %12 = vsyncadd [#allocation3], %s11
      %s13 = sshll.u32 [#allocation2], 4
      %s14 = int_to_ptr.vmem [resolvable:$true] %s13
      %19 = dma.hbm_to_vmem [thread:$0]  %s0, 8192, %s14, [#allocation3], 256, 256, 16
    $region5: #{sphere_forward.1} parent=1 // pred_fallthru
      _
    // Predicated region
    $region6: #{sphere_forward.1} parent=1 // pred_check
      _
    $region7: #{sphere_forward.1} parent=1 // pred_check_branch
      %21 = sbr.rel (0) target = $region9
    $region8: #{sphere_forward.1} parent=1 // pred_region
      _
    $region9: #{sphere_forward.1} parent=1 // pred_fallthru
      _
    // Predicated region
    $region10: #{sphere_forward.1} parent=1 // pred_check
      _
    $region11: #{sphere_forward.1} parent=1 // pred_check_branch
      %23 = sbr.rel (0) target = $region13
    $region12: #{sphere_forward.1} parent=1 // pred_region
      %24 = dma.done [#allocation3], 8192
    $region13: #{sphere_forward.1} parent=1 // pred_fallthru
      _
    %v25 = vld [vmem:[%s1] sm:$0x3]
    %v26 = vld [vmem:[#allocation2] sm:$0xff]
    %v27 = vld [vmem:[#allocation2 + $0x8] sm:$0xff]
    %v28 = vld [vmem:[#allocation2 + $0x10] sm:$0xff]
    %v29 = vld [vmem:[#allocation2 + $0x18] sm:$0xff]
    %v30 = vld [vmem:[#allocation2 + $0x20] sm:$0xff]
    %v31 = vld [vmem:[#allocation2 + $0x28] sm:$0xff]
    %v32 = vld [vmem:[#allocation2 + $0x30] sm:$0xff]
    %v33 = vld [vmem:[#allocation2 + $0x38] sm:$0xff]
    %v34 = vld [vmem:[#allocation2 + $0x40] sm:$0xff]
    %v35 = vld [vmem:[#allocation2 + $0x48] sm:$0xff]
    %v36 = vld [vmem:[#allocation2 + $0x50] sm:$0xff]
    %v37 = vld [vmem:[#allocation2 + $0x58] sm:$0xff]
    %v38 = vld [vmem:[#allocation2 + $0x60] sm:$0xff]
    %v39 = vld [vmem:[#allocation2 + $0x68] sm:$0xff]
    %v40 = vld [vmem:[#allocation2 + $0x70] sm:$0xff]
    %v41 = vld [vmem:[#allocation2 + $0x78] sm:$0xff]
    %v42 = vld [vmem:[#allocation2 + $0x80] sm:$0xff]
    %v43 = vld [vmem:[#allocation2 + $0x88] sm:$0xff]
    %v44 = vld [vmem:[#allocation2 + $0x90] sm:$0xff]
    %v45 = vld [vmem:[#allocation2 + $0x98] sm:$0xff]
    %v46 = vld [vmem:[#allocation2 + $0xa0] sm:$0xff]
    %v47 = vld [vmem:[#allocation2 + $0xa8] sm:$0xff]
    %v48 = vld [vmem:[#allocation2 + $0xb0] sm:$0xff]
    %v49 = vld [vmem:[#allocation2 + $0xb8] sm:$0xff]
    %v50 = vld [vmem:[#allocation2 + $0xc0] sm:$0xff]
    %v51 = vld [vmem:[#allocation2 + $0xc8] sm:$0xff]
    %v52 = vld [vmem:[#allocation2 + $0xd0] sm:$0xff]
    %v53 = vld [vmem:[#allocation2 + $0xd8] sm:$0xff]
    %v54 = vld [vmem:[#allocation2 + $0xe0] sm:$0xff]
    %v55 = vld [vmem:[#allocation2 + $0xe8] sm:$0xff]
    %v56 = vld [vmem:[#allocation2 + $0xf0] sm:$0xff]
    %v57 = vld [vmem:[#allocation2 + $0xf8] sm:$0xff]
    %v58 = vld [vmem:[#allocation2 + $0x100] sm:$0xff]
    %v59 = vld [vmem:[#allocation2 + $0x108] sm:$0xff]
    %v60 = vld [vmem:[#allocation2 + $0x110] sm:$0xff]
    %v61 = vld [vmem:[#allocation2 + $0x118] sm:$0xff]
    %v62 = vld [vmem:[#allocation2 + $0x120] sm:$0xff]
    %v63 = vld [vmem:[#allocation2 + $0x128] sm:$0xff]
    %v64 = vld [vmem:[#allocation2 + $0x130] sm:$0xff]
    %v65 = vld [vmem:[#allocation2 + $0x138] sm:$0xff]
    %v66 = vld [vmem:[#allocation2 + $0x140] sm:$0xff]
    %v67 = vld [vmem:[#allocation2 + $0x148] sm:$0xff]
    %v68 = vld [vmem:[#allocation2 + $0x150] sm:$0xff]
    %v69 = vld [vmem:[#allocation2 + $0x158] sm:$0xff]
    %v70 = vld [vmem:[#allocation2 + $0x160] sm:$0xff]
    %v71 = vld [vmem:[#allocation2 + $0x168] sm:$0xff]
    %v72 = vld [vmem:[#allocation2 + $0x170] sm:$0xff]
    %v73 = vld [vmem:[#allocation2 + $0x178] sm:$0xff]
    %v74 = vld [vmem:[#allocation2 + $0x180] sm:$0xff]
    %v75 = vld [vmem:[#allocation2 + $0x188] sm:$0xff]
    %v76 = vld [vmem:[#allocation2 + $0x190] sm:$0xff]
    %v77 = vld [vmem:[#allocation2 + $0x198] sm:$0xff]
    %v78 = vld [vmem:[#allocation2 + $0x1a0] sm:$0xff]
    %v79 = vld [vmem:[#allocation2 + $0x1a8] sm:$0xff]
    %v80 = vld [vmem:[#allocation2 + $0x1b0] sm:$0xff]
    %v81 = vld [vmem:[#allocation2 + $0x1b8] sm:$0xff]
    %v82 = vld [vmem:[#allocation2 + $0x1c0] sm:$0xff]
    %v83 = vld [vmem:[#allocation2 + $0x1c8] sm:$0xff]
    %v84 = vld [vmem:[#allocation2 + $0x1d0] sm:$0xff]
    %v85 = vld [vmem:[#allocation2 + $0x1d8] sm:$0xff]
    %v86 = vld [vmem:[#allocation2 + $0x1e0] sm:$0xff]
    %v87 = vld [vmem:[#allocation2 + $0x1e8] sm:$0xff]
    %v88 = vld [vmem:[#allocation2 + $0x1f0] sm:$0xff]
    %v89 = vld [vmem:[#allocation2 + $0x1f8] sm:$0xff]
    %v91 = vlaneseq
    %v92 = vshrl.u32 %v91, 7
    %v93 = vsub.s32 0, %v92
    %v94 = vrot.slane %v25, %v93
    %v95 = vlaneseq
    %v96 = vshrl.u32 %v95, 7
    %v97 = vsub.s32 1, %v96
    %v98 = vrot.slane %v25, %v97
    %v101 = vand.u32 %v27, 4294901760
    %102 = vmatprep.subr.mxu0 %v101
    %v103 = vand.u32 %v26, 4294901760
    %104 = vmatpush1.msra.mxu0 %v103
    %v105 = vand.u32 %v29, 4294901760
    %106 = vmatprep.subr.mxu0 %v105
    %v107 = vand.u32 %v28, 4294901760
    %108 = vmatpush1.msra.mxu0 %v107
    %v109 = vand.u32 %v31, 4294901760
    %110 = vmatprep.subr.mxu0 %v109
    %v111 = vand.u32 %v30, 4294901760
    %112 = vmatpush1.msra.mxu0 %v111
    %v113 = vand.u32 %v33, 4294901760
    %114 = vmatprep.subr.mxu0 %v113
    %v115 = vand.u32 %v32, 4294901760
    %116 = vmatpush1.msra.mxu0 %v115
    %v117 = vand.u32 %v35, 4294901760
    %118 = vmatprep.subr.mxu0 %v117
    %v119 = vand.u32 %v34, 4294901760
    %120 = vmatpush1.msra.mxu0 %v119
    %v121 = vand.u32 %v37, 4294901760
    %122 = vmatprep.subr.mxu0 %v121
    %v123 = vand.u32 %v36, 4294901760
    %124 = vmatpush1.msra.mxu0 %v123
    %v125 = vand.u32 %v39, 4294901760
    %126 = vmatprep.subr.mxu0 %v125
    %v127 = vand.u32 %v38, 4294901760
    %128 = vmatpush1.msra.mxu0 %v127
    %v129 = vand.u32 %v41, 4294901760
    %130 = vmatprep.subr.mxu0 %v129
    %v131 = vand.u32 %v40, 4294901760
    %132 = vmatpush1.msra.mxu0 %v131
    %v133 = vand.u32 %v43, 4294901760
    %134 = vmatprep.subr.mxu0 %v133
    %v135 = vand.u32 %v42, 4294901760
    %136 = vmatpush1.msra.mxu0 %v135
    %v137 = vand.u32 %v45, 4294901760
    %138 = vmatprep.subr.mxu0 %v137
    %v139 = vand.u32 %v44, 4294901760
    %140 = vmatpush1.msra.mxu0 %v139
    %v141 = vand.u32 %v47, 4294901760
    %142 = vmatprep.subr.mxu0 %v141
    %v143 = vand.u32 %v46, 4294901760
    %144 = vmatpush1.msra.mxu0 %v143
    %v145 = vand.u32 %v49, 4294901760
    %146 = vmatprep.subr.mxu0 %v145
    %v147 = vand.u32 %v48, 4294901760
    %148 = vmatpush1.msra.mxu0 %v147
    %v149 = vand.u32 %v51, 4294901760
    %150 = vmatprep.subr.mxu0 %v149
    %v151 = vand.u32 %v50, 4294901760
    %152 = vmatpush1.msra.mxu0 %v151
    %v153 = vand.u32 %v53, 4294901760
    %154 = vmatprep.subr.mxu0 %v153
    %v155 = vand.u32 %v52, 4294901760
    %156 = vmatpush1.msra.mxu0 %v155
    %v157 = vand.u32 %v55, 4294901760
    %158 = vmatprep.subr.mxu0 %v157
    %v159 = vand.u32 %v54, 4294901760
    %160 = vmatpush1.msra.mxu0 %v159
    %v161 = vand.u32 %v57, 4294901760
    %162 = vmatprep.subr.mxu0 %v161
    %v163 = vand.u32 %v56, 4294901760
    %164 = vmatpush1.msra.mxu0 %v163
    %v165 = vand.u32 %v59, 4294901760
    %166 = vmatprep.subr.mxu0 %v165
    %v167 = vand.u32 %v58, 4294901760
    %168 = vmatpush1.msra.mxu0 %v167
    %v169 = vand.u32 %v61, 4294901760
    %170 = vmatprep.subr.mxu0 %v169
    %v171 = vand.u32 %v60, 4294901760
    %172 = vmatpush1.msra.mxu0 %v171
    %v173 = vand.u32 %v63, 4294901760
    %174 = vmatprep.subr.mxu0 %v173
    %v175 = vand.u32 %v62, 4294901760
    %176 = vmatpush1.msra.mxu0 %v175
    %v177 = vand.u32 %v65, 4294901760
    %178 = vmatprep.subr.mxu0 %v177
    %v179 = vand.u32 %v64, 4294901760
    %180 = vmatpush1.msra.mxu0 %v179
    %v181 = vand.u32 %v67, 4294901760
    %182 = vmatprep.subr.mxu0 %v181
    %v183 = vand.u32 %v66, 4294901760
    %184 = vmatpush1.msra.mxu0 %v183
    %v185 = vand.u32 %v69, 4294901760
    %186 = vmatprep.subr.mxu0 %v185
    %v187 = vand.u32 %v68, 4294901760
    %188 = vmatpush1.msra.mxu0 %v187
    %v189 = vand.u32 %v71, 4294901760
    %190 = vmatprep.subr.mxu0 %v189
    %v191 = vand.u32 %v70, 4294901760
    %192 = vmatpush1.msra.mxu0 %v191
    %v193 = vand.u32 %v73, 4294901760
    %194 = vmatprep.subr.mxu0 %v193
    %v195 = vand.u32 %v72, 4294901760
    %196 = vmatpush1.msra.mxu0 %v195
    %v197 = vand.u32 %v75, 4294901760
    %198 = vmatprep.subr.mxu0 %v197
    %v199 = vand.u32 %v74, 4294901760
    %200 = vmatpush1.msra.mxu0 %v199
    %v201 = vand.u32 %v77, 4294901760
    %202 = vmatprep.subr.mxu0 %v201
    %v203 = vand.u32 %v76, 4294901760
    %204 = vmatpush1.msra.mxu0 %v203
    %v205 = vand.u32 %v79, 4294901760
    %206 = vmatprep.subr.mxu0 %v205
    %v207 = vand.u32 %v78, 4294901760
    %208 = vmatpush1.msra.mxu0 %v207
    %v209 = vand.u32 %v81, 4294901760
    %210 = vmatprep.subr.mxu0 %v209
    %v211 = vand.u32 %v80, 4294901760
    %212 = vmatpush1.msra.mxu0 %v211
    %v213 = vand.u32 %v83, 4294901760
    %214 = vmatprep.subr.mxu0 %v213
    %v215 = vand.u32 %v82, 4294901760
    %216 = vmatpush1.msra.mxu0 %v215
    %v217 = vand.u32 %v85, 4294901760
    %218 = vmatprep.subr.mxu0 %v217
    %v219 = vand.u32 %v84, 4294901760
    %220 = vmatpush1.msra.mxu0 %v219
    %v221 = vand.u32 %v87, 4294901760
    %222 = vmatprep.subr.mxu0 %v221
    %v223 = vand.u32 %v86, 4294901760
    %224 = vmatpush1.msra.mxu0 %v223
    %v225 = vand.u32 %v89, 4294901760
    %226 = vmatprep.subr.mxu0 %v225
    %v227 = vand.u32 %v88, 4294901760
    %228 = vmatpush1.msra.mxu0 %v227
    %v229 = vand.u32 %v98, 4294901760
    %v230 = vsub.f32 %v98, %v229
    %v231 = vand.u32 %v230, 4294901760
    %v232 = vsub.f32 %v230, %v231
    %v233 = vand.u32 %v232, 4294901760
    %234 = vmatprep.mubr.f32.mxu0 %v233
    %v235 = vand.u32 %v94, 4294901760
    %v236 = vsub.f32 %v94, %v235
    %v237 = vand.u32 %v236, 4294901760
    %v238 = vsub.f32 %v236, %v237
    %v239 = vand.u32 %v238, 4294901760
    %240 = vmatmul.mubr.f32.gmra.mrb[0].mxu0 %v239
    %v241 = vpop.f32.mrb[0].mxu0
    %v242 = vadd.f32 0.0, %v241
    %v243 = vpop.f32.mrb[0].mxu0
    %v244 = vadd.f32 0.0, %v243
    %245 = vdwg.mxu0
    %v246 = vand.u32 %v27, 4294901760
    %v247 = vsub.f32 %v27, %v246
    %v248 = vand.u32 %v247, 4294901760
    %v249 = vsub.f32 %v247, %v248
    %v250 = vand.u32 %v249, 4294901760
    %251 = vmatprep.subr.mxu0 %v250
    %v252 = vand.u32 %v26, 4294901760
    %v253 = vsub.f32 %v26, %v252
    %v254 = vand.u32 %v253, 4294901760
    %v255 = vsub.f32 %v253, %v254
    %v256 = vand.u32 %v255, 4294901760
    %257 = vmatpush1.msra.mxu0 %v256
    %v258 = vand.u32 %v29, 4294901760
    %v259 = vsub.f32 %v29, %v258
    %v260 = vand.u32 %v259, 4294901760
    %v261 = vsub.f32 %v259, %v260
    %v262 = vand.u32 %v261, 4294901760
    %263 = vmatprep.subr.mxu0 %v262
    %v264 = vand.u32 %v28, 4294901760
    %v265 = vsub.f32 %v28, %v264
    %v266 = vand.u32 %v265, 4294901760
    %v267 = vsub.f32 %v265, %v266
    %v268 = vand.u32 %v267, 4294901760
    %269 = vmatpush1.msra.mxu0 %v268
    %v270 = vand.u32 %v31, 4294901760
    %v271 = vsub.f32 %v31, %v270
    %v272 = vand.u32 %v271, 4294901760
    %v273 = vsub.f32 %v271, %v272
    %v274 = vand.u32 %v273, 4294901760
    %275 = vmatprep.subr.mxu0 %v274
    %v276 = vand.u32 %v30, 4294901760
    %v277 = vsub.f32 %v30, %v276
    %v278 = vand.u32 %v277, 4294901760
    %v279 = vsub.f32 %v277, %v278
    %v280 = vand.u32 %v279, 4294901760
    %281 = vmatpush1.msra.mxu0 %v280
    %v282 = vand.u32 %v33, 4294901760
    %v283 = vsub.f32 %v33, %v282
    %v284 = vand.u32 %v283, 4294901760
    %v285 = vsub.f32 %v283, %v284
    %v286 = vand.u32 %v285, 4294901760
    %287 = vmatprep.subr.mxu0 %v286
    %v288 = vand.u32 %v32, 4294901760
    %v289 = vsub.f32 %v32, %v288
    %v290 = vand.u32 %v289, 4294901760
    %v291 = vsub.f32 %v289, %v290
    %v292 = vand.u32 %v291, 4294901760
    %293 = vmatpush1.msra.mxu0 %v292
    %v294 = vand.u32 %v35, 4294901760
    %v295 = vsub.f32 %v35, %v294
    %v296 = vand.u32 %v295, 4294901760
    %v297 = vsub.f32 %v295, %v296
    %v298 = vand.u32 %v297, 4294901760
    %299 = vmatprep.subr.mxu0 %v298
    %v300 = vand.u32 %v34, 4294901760
    %v301 = vsub.f32 %v34, %v300
    %v302 = vand.u32 %v301, 4294901760
    %v303 = vsub.f32 %v301, %v302
    %v304 = vand.u32 %v303, 4294901760
    %305 = vmatpush1.msra.mxu0 %v304
    %v306 = vand.u32 %v37, 4294901760
    %v307 = vsub.f32 %v37, %v306
    %v308 = vand.u32 %v307, 4294901760
    %v309 = vsub.f32 %v307, %v308
    %v310 = vand.u32 %v309, 4294901760
    %311 = vmatprep.subr.mxu0 %v310
    %v312 = vand.u32 %v36, 4294901760
    %v313 = vsub.f32 %v36, %v312
    %v314 = vand.u32 %v313, 4294901760
    %v315 = vsub.f32 %v313, %v314
    %v316 = vand.u32 %v315, 4294901760
    %317 = vmatpush1.msra.mxu0 %v316
    %v318 = vand.u32 %v39, 4294901760
    %v319 = vsub.f32 %v39, %v318
    %v320 = vand.u32 %v319, 4294901760
    %v321 = vsub.f32 %v319, %v320
    %v322 = vand.u32 %v321, 4294901760
    %323 = vmatprep.subr.mxu0 %v322
    %v324 = vand.u32 %v38, 4294901760
    %v325 = vsub.f32 %v38, %v324
    %v326 = vand.u32 %v325, 4294901760
    %v327 = vsub.f32 %v325, %v326
    %v328 = vand.u32 %v327, 4294901760
    %329 = vmatpush1.msra.mxu0 %v328
    %v330 = vand.u32 %v41, 4294901760
    %v331 = vsub.f32 %v41, %v330
    %v332 = vand.u32 %v331, 4294901760
    %v333 = vsub.f32 %v331, %v332
    %v334 = vand.u32 %v333, 4294901760
    %335 = vmatprep.subr.mxu0 %v334
    %v336 = vand.u32 %v40, 4294901760
    %v337 = vsub.f32 %v40, %v336
    %v338 = vand.u32 %v337, 4294901760
    %v339 = vsub.f32 %v337, %v338
    %v340 = vand.u32 %v339, 4294901760
    %341 = vmatpush1.msra.mxu0 %v340
    %v342 = vand.u32 %v43, 4294901760
    %v343 = vsub.f32 %v43, %v342
    %v344 = vand.u32 %v343, 4294901760
    %v345 = vsub.f32 %v343, %v344
    %v346 = vand.u32 %v345, 4294901760
    %347 = vmatprep.subr.mxu0 %v346
    %v348 = vand.u32 %v42, 4294901760
    %v349 = vsub.f32 %v42, %v348
    %v350 = vand.u32 %v349, 4294901760
    %v351 = vsub.f32 %v349, %v350
    %v352 = vand.u32 %v351, 4294901760
    %353 = vmatpush1.msra.mxu0 %v352
    %v354 = vand.u32 %v45, 4294901760
    %v355 = vsub.f32 %v45, %v354
    %v356 = vand.u32 %v355, 4294901760
    %v357 = vsub.f32 %v355, %v356
    %v358 = vand.u32 %v357, 4294901760
    %359 = vmatprep.subr.mxu0 %v358
    %v360 = vand.u32 %v44, 4294901760
    %v361 = vsub.f32 %v44, %v360
    %v362 = vand.u32 %v361, 4294901760
    %v363 = vsub.f32 %v361, %v362
    %v364 = vand.u32 %v363, 4294901760
    %365 = vmatpush1.msra.mxu0 %v364
    %v366 = vand.u32 %v47, 4294901760
    %v367 = vsub.f32 %v47, %v366
    %v368 = vand.u32 %v367, 4294901760
    %v369 = vsub.f32 %v367, %v368
    %v370 = vand.u32 %v369, 4294901760
    %371 = vmatprep.subr.mxu0 %v370
    %v372 = vand.u32 %v46, 4294901760
    %v373 = vsub.f32 %v46, %v372
    %v374 = vand.u32 %v373, 4294901760
    %v375 = vsub.f32 %v373, %v374
    %v376 = vand.u32 %v375, 4294901760
    %377 = vmatpush1.msra.mxu0 %v376
    %v378 = vand.u32 %v49, 4294901760
    %v379 = vsub.f32 %v49, %v378
    %v380 = vand.u32 %v379, 4294901760
    %v381 = vsub.f32 %v379, %v380
    %v382 = vand.u32 %v381, 4294901760
    %383 = vmatprep.subr.mxu0 %v382
    %v384 = vand.u32 %v48, 4294901760
    %v385 = vsub.f32 %v48, %v384
    %v386 = vand.u32 %v385, 4294901760
    %v387 = vsub.f32 %v385, %v386
    %v388 = vand.u32 %v387, 4294901760
    %389 = vmatpush1.msra.mxu0 %v388
    %v390 = vand.u32 %v51, 4294901760
    %v391 = vsub.f32 %v51, %v390
    %v392 = vand.u32 %v391, 4294901760
    %v393 = vsub.f32 %v391, %v392
    %v394 = vand.u32 %v393, 4294901760
    %395 = vmatprep.subr.mxu0 %v394
    %v396 = vand.u32 %v50, 4294901760
    %v397 = vsub.f32 %v50, %v396
    %v398 = vand.u32 %v397, 4294901760
    %v399 = vsub.f32 %v397, %v398
    %v400 = vand.u32 %v399, 4294901760
    %401 = vmatpush1.msra.mxu0 %v400
    %v402 = vand.u32 %v53, 4294901760
    %v403 = vsub.f32 %v53, %v402
    %v404 = vand.u32 %v403, 4294901760
    %v405 = vsub.f32 %v403, %v404
    %v406 = vand.u32 %v405, 4294901760
    %407 = vmatprep.subr.mxu0 %v406
    %v408 = vand.u32 %v52, 4294901760
    %v409 = vsub.f32 %v52, %v408
    %v410 = vand.u32 %v409, 4294901760
    %v411 = vsub.f32 %v409, %v410
    %v412 = vand.u32 %v411, 4294901760
    %413 = vmatpush1.msra.mxu0 %v412
    %v414 = vand.u32 %v55, 4294901760
    %v415 = vsub.f32 %v55, %v414
    %v416 = vand.u32 %v415, 4294901760
    %v417 = vsub.f32 %v415, %v416
    %v418 = vand.u32 %v417, 4294901760
    %419 = vmatprep.subr.mxu0 %v418
    %v420 = vand.u32 %v54, 4294901760
    %v421 = vsub.f32 %v54, %v420
    %v422 = vand.u32 %v421, 4294901760
    %v423 = vsub.f32 %v421, %v422
    %v424 = vand.u32 %v423, 4294901760
    %425 = vmatpush1.msra.mxu0 %v424
    %v426 = vand.u32 %v57, 4294901760
    %v427 = vsub.f32 %v57, %v426
    %v428 = vand.u32 %v427, 4294901760
    %v429 = vsub.f32 %v427, %v428
    %v430 = vand.u32 %v429, 4294901760
    %431 = vmatprep.subr.mxu0 %v430
    %v432 = vand.u32 %v56, 4294901760
    %v433 = vsub.f32 %v56, %v432
    %v434 = vand.u32 %v433, 4294901760
    %v435 = vsub.f32 %v433, %v434
    %v436 = vand.u32 %v435, 4294901760
    %437 = vmatpush1.msra.mxu0 %v436
    %v438 = vand.u32 %v59, 4294901760
    %v439 = vsub.f32 %v59, %v438
    %v440 = vand.u32 %v439, 4294901760
    %v441 = vsub.f32 %v439, %v440
    %v442 = vand.u32 %v441, 4294901760
    %443 = vmatprep.subr.mxu0 %v442
    %v444 = vand.u32 %v58, 4294901760
    %v445 = vsub.f32 %v58, %v444
    %v446 = vand.u32 %v445, 4294901760
    %v447 = vsub.f32 %v445, %v446
    %v448 = vand.u32 %v447, 4294901760
    %449 = vmatpush1.msra.mxu0 %v448
    %v450 = vand.u32 %v61, 4294901760
    %v451 = vsub.f32 %v61, %v450
    %v452 = vand.u32 %v451, 4294901760
    %v453 = vsub.f32 %v451, %v452
    %v454 = vand.u32 %v453, 4294901760
    %455 = vmatprep.subr.mxu0 %v454
    %v456 = vand.u32 %v60, 4294901760
    %v457 = vsub.f32 %v60, %v456
    %v458 = vand.u32 %v457, 4294901760
    %v459 = vsub.f32 %v457, %v458
    %v460 = vand.u32 %v459, 4294901760
    %461 = vmatpush1.msra.mxu0 %v460
    %v462 = vand.u32 %v63, 4294901760
    %v463 = vsub.f32 %v63, %v462
    %v464 = vand.u32 %v463, 4294901760
    %v465 = vsub.f32 %v463, %v464
    %v466 = vand.u32 %v465, 4294901760
    %467 = vmatprep.subr.mxu0 %v466
    %v468 = vand.u32 %v62, 4294901760
    %v469 = vsub.f32 %v62, %v468
    %v470 = vand.u32 %v469, 4294901760
    %v471 = vsub.f32 %v469, %v470
    %v472 = vand.u32 %v471, 4294901760
    %473 = vmatpush1.msra.mxu0 %v472
    %v474 = vand.u32 %v65, 4294901760
    %v475 = vsub.f32 %v65, %v474
    %v476 = vand.u32 %v475, 4294901760
    %v477 = vsub.f32 %v475, %v476
    %v478 = vand.u32 %v477, 4294901760
    %479 = vmatprep.subr.mxu0 %v478
    %v480 = vand.u32 %v64, 4294901760
    %v481 = vsub.f32 %v64, %v480
    %v482 = vand.u32 %v481, 4294901760
    %v483 = vsub.f32 %v481, %v482
    %v484 = vand.u32 %v483, 4294901760
    %485 = vmatpush1.msra.mxu0 %v484
    %v486 = vand.u32 %v67, 4294901760
    %v487 = vsub.f32 %v67, %v486
    %v488 = vand.u32 %v487, 4294901760
    %v489 = vsub.f32 %v487, %v488
    %v490 = vand.u32 %v489, 4294901760
    %491 = vmatprep.subr.mxu0 %v490
    %v492 = vand.u32 %v66, 4294901760
    %v493 = vsub.f32 %v66, %v492
    %v494 = vand.u32 %v493, 4294901760
    %v495 = vsub.f32 %v493, %v494
    %v496 = vand.u32 %v495, 4294901760
    %497 = vmatpush1.msra.mxu0 %v496
    %v498 = vand.u32 %v69, 4294901760
    %v499 = vsub.f32 %v69, %v498
    %v500 = vand.u32 %v499, 4294901760
    %v501 = vsub.f32 %v499, %v500
    %v502 = vand.u32 %v501, 4294901760
    %503 = vmatprep.subr.mxu0 %v502
    %v504 = vand.u32 %v68, 4294901760
    %v505 = vsub.f32 %v68, %v504
    %v506 = vand.u32 %v505, 4294901760
    %v507 = vsub.f32 %v505, %v506
    %v508 = vand.u32 %v507, 4294901760
    %509 = vmatpush1.msra.mxu0 %v508
    %v510 = vand.u32 %v71, 4294901760
    %v511 = vsub.f32 %v71, %v510
    %v512 = vand.u32 %v511, 4294901760
    %v513 = vsub.f32 %v511, %v512
    %v514 = vand.u32 %v513, 4294901760
    %515 = vmatprep.subr.mxu0 %v514
    %v516 = vand.u32 %v70, 4294901760
    %v517 = vsub.f32 %v70, %v516
    %v518 = vand.u32 %v517, 4294901760
    %v519 = vsub.f32 %v517, %v518
    %v520 = vand.u32 %v519, 4294901760
    %521 = vmatpush1.msra.mxu0 %v520
    %v522 = vand.u32 %v73, 4294901760
    %v523 = vsub.f32 %v73, %v522
    %v524 = vand.u32 %v523, 4294901760
    %v525 = vsub.f32 %v523, %v524
    %v526 = vand.u32 %v525, 4294901760
    %527 = vmatprep.subr.mxu0 %v526
    %v528 = vand.u32 %v72, 4294901760
    %v529 = vsub.f32 %v72, %v528
    %v530 = vand.u32 %v529, 4294901760
    %v531 = vsub.f32 %v529, %v530
    %v532 = vand.u32 %v531, 4294901760
    %533 = vmatpush1.msra.mxu0 %v532
    %v534 = vand.u32 %v75, 4294901760
    %v535 = vsub.f32 %v75, %v534
    %v536 = vand.u32 %v535, 4294901760
    %v537 = vsub.f32 %v535, %v536
    %v538 = vand.u32 %v537, 4294901760
    %539 = vmatprep.subr.mxu0 %v538
    %v540 = vand.u32 %v74, 4294901760
    %v541 = vsub.f32 %v74, %v540
    %v542 = vand.u32 %v541, 4294901760
    %v543 = vsub.f32 %v541, %v542
    %v544 = vand.u32 %v543, 4294901760
    %545 = vmatpush1.msra.mxu0 %v544
    %v546 = vand.u32 %v77, 4294901760
    %v547 = vsub.f32 %v77, %v546
    %v548 = vand.u32 %v547, 4294901760
    %v549 = vsub.f32 %v547, %v548
    %v550 = vand.u32 %v549, 4294901760
    %551 = vmatprep.subr.mxu0 %v550
    %v552 = vand.u32 %v76, 4294901760
    %v553 = vsub.f32 %v76, %v552
    %v554 = vand.u32 %v553, 4294901760
    %v555 = vsub.f32 %v553, %v554
    %v556 = vand.u32 %v555, 4294901760
    %557 = vmatpush1.msra.mxu0 %v556
    %v558 = vand.u32 %v79, 4294901760
    %v559 = vsub.f32 %v79, %v558
    %v560 = vand.u32 %v559, 4294901760
    %v561 = vsub.f32 %v559, %v560
    %v562 = vand.u32 %v561, 4294901760
    %563 = vmatprep.subr.mxu0 %v562
    %v564 = vand.u32 %v78, 4294901760
    %v565 = vsub.f32 %v78, %v564
    %v566 = vand.u32 %v565, 4294901760
    %v567 = vsub.f32 %v565, %v566
    %v568 = vand.u32 %v567, 4294901760
    %569 = vmatpush1.msra.mxu0 %v568
    %v570 = vand.u32 %v81, 4294901760
    %v571 = vsub.f32 %v81, %v570
    %v572 = vand.u32 %v571, 4294901760
    %v573 = vsub.f32 %v571, %v572
    %v574 = vand.u32 %v573, 4294901760
    %575 = vmatprep.subr.mxu0 %v574
    %v576 = vand.u32 %v80, 4294901760
    %v577 = vsub.f32 %v80, %v576
    %v578 = vand.u32 %v577, 4294901760
    %v579 = vsub.f32 %v577, %v578
    %v580 = vand.u32 %v579, 4294901760
    %581 = vmatpush1.msra.mxu0 %v580
    %v582 = vand.u32 %v83, 4294901760
    %v583 = vsub.f32 %v83, %v582
    %v584 = vand.u32 %v583, 4294901760
    %v585 = vsub.f32 %v583, %v584
    %v586 = vand.u32 %v585, 4294901760
    %587 = vmatprep.subr.mxu0 %v586
    %v588 = vand.u32 %v82, 4294901760
    %v589 = vsub.f32 %v82, %v588
    %v590 = vand.u32 %v589, 4294901760
    %v591 = vsub.f32 %v589, %v590
    %v592 = vand.u32 %v591, 4294901760
    %593 = vmatpush1.msra.mxu0 %v592
    %v594 = vand.u32 %v85, 4294901760
    %v595 = vsub.f32 %v85, %v594
    %v596 = vand.u32 %v595, 4294901760
    %v597 = vsub.f32 %v595, %v596
    %v598 = vand.u32 %v597, 4294901760
    %599 = vmatprep.subr.mxu0 %v598
    %v600 = vand.u32 %v84, 4294901760
    %v601 = vsub.f32 %v84, %v600
    %v602 = vand.u32 %v601, 4294901760
    %v603 = vsub.f32 %v601, %v602
    %v604 = vand.u32 %v603, 4294901760
    %605 = vmatpush1.msra.mxu0 %v604
    %v606 = vand.u32 %v87, 4294901760
    %v607 = vsub.f32 %v87, %v606
    %v608 = vand.u32 %v607, 4294901760
    %v609 = vsub.f32 %v607, %v608
    %v610 = vand.u32 %v609, 4294901760
    %611 = vmatprep.subr.mxu0 %v610
    %v612 = vand.u32 %v86, 4294901760
    %v613 = vsub.f32 %v86, %v612
    %v614 = vand.u32 %v613, 4294901760
    %v615 = vsub.f32 %v613, %v614
    %v616 = vand.u32 %v615, 4294901760
    %617 = vmatpush1.msra.mxu0 %v616
    %v618 = vand.u32 %v89, 4294901760
    %v619 = vsub.f32 %v89, %v618
    %v620 = vand.u32 %v619, 4294901760
    %v621 = vsub.f32 %v619, %v620
    %v622 = vand.u32 %v621, 4294901760
    %623 = vmatprep.subr.mxu0 %v622
    %v624 = vand.u32 %v88, 4294901760
    %v625 = vsub.f32 %v88, %v624
    %v626 = vand.u32 %v625, 4294901760
    %v627 = vsub.f32 %v625, %v626
    %v628 = vand.u32 %v627, 4294901760
    %629 = vmatpush1.msra.mxu0 %v628
    %v630 = vand.u32 %v98, 4294901760
    %631 = vmatprep.mubr.f32.mxu0 %v630
    %v632 = vand.u32 %v94, 4294901760
    %633 = vmatmul.mubr.f32.gmra.mrb[0].mxu0 %v632
    %v634 = vpop.f32.mrb[0].mxu0
    %v635 = vadd.f32 %v242, %v634
    %v636 = vpop.f32.mrb[0].mxu0
    %v637 = vadd.f32 %v244, %v636
    %638 = vdwg.mxu0
    %v639 = vand.u32 %v27, 4294901760
    %v640 = vsub.f32 %v27, %v639
    %641 = vmatprep.subr.mxu0 %v640
    %v642 = vand.u32 %v26, 4294901760
    %v643 = vsub.f32 %v26, %v642
    %644 = vmatpush1.msra.mxu0 %v643
    %v645 = vand.u32 %v29, 4294901760
    %v646 = vsub.f32 %v29, %v645
    %647 = vmatprep.subr.mxu0 %v646
    %v648 = vand.u32 %v28, 4294901760
    %v649 = vsub.f32 %v28, %v648
    %650 = vmatpush1.msra.mxu0 %v649
    %v651 = vand.u32 %v31, 4294901760
    %v652 = vsub.f32 %v31, %v651
    %653 = vmatprep.subr.mxu0 %v652
    %v654 = vand.u32 %v30, 4294901760
    %v655 = vsub.f32 %v30, %v654
    %656 = vmatpush1.msra.mxu0 %v655
    %v657 = vand.u32 %v33, 4294901760
    %v658 = vsub.f32 %v33, %v657
    %659 = vmatprep.subr.mxu0 %v658
    %v660 = vand.u32 %v32, 4294901760
    %v661 = vsub.f32 %v32, %v660
    %662 = vmatpush1.msra.mxu0 %v661
    %v663 = vand.u32 %v35, 4294901760
    %v664 = vsub.f32 %v35, %v663
    %665 = vmatprep.subr.mxu0 %v664
    %v666 = vand.u32 %v34, 4294901760
    %v667 = vsub.f32 %v34, %v666
    %668 = vmatpush1.msra.mxu0 %v667
    %v669 = vand.u32 %v37, 4294901760
    %v670 = vsub.f32 %v37, %v669
    %671 = vmatprep.subr.mxu0 %v670
    %v672 = vand.u32 %v36, 4294901760
    %v673 = vsub.f32 %v36, %v672
    %674 = vmatpush1.msra.mxu0 %v673
    %v675 = vand.u32 %v39, 4294901760
    %v676 = vsub.f32 %v39, %v675
    %677 = vmatprep.subr.mxu0 %v676
    %v678 = vand.u32 %v38, 4294901760
    %v679 = vsub.f32 %v38, %v678
    %680 = vmatpush1.msra.mxu0 %v679
    %v681 = vand.u32 %v41, 4294901760
    %v682 = vsub.f32 %v41, %v681
    %683 = vmatprep.subr.mxu0 %v682
    %v684 = vand.u32 %v40, 4294901760
    %v685 = vsub.f32 %v40, %v684
    %686 = vmatpush1.msra.mxu0 %v685
    %v687 = vand.u32 %v43, 4294901760
    %v688 = vsub.f32 %v43, %v687
    %689 = vmatprep.subr.mxu0 %v688
    %v690 = vand.u32 %v42, 4294901760
    %v691 = vsub.f32 %v42, %v690
    %692 = vmatpush1.msra.mxu0 %v691
    %v693 = vand.u32 %v45, 4294901760
    %v694 = vsub.f32 %v45, %v693
    %695 = vmatprep.subr.mxu0 %v694
    %v696 = vand.u32 %v44, 4294901760
    %v697 = vsub.f32 %v44, %v696
    %698 = vmatpush1.msra.mxu0 %v697
    %v699 = vand.u32 %v47, 4294901760
    %v700 = vsub.f32 %v47, %v699
    %701 = vmatprep.subr.mxu0 %v700
    %v702 = vand.u32 %v46, 4294901760
    %v703 = vsub.f32 %v46, %v702
    %704 = vmatpush1.msra.mxu0 %v703
    %v705 = vand.u32 %v49, 4294901760
    %v706 = vsub.f32 %v49, %v705
    %707 = vmatprep.subr.mxu0 %v706
    %v708 = vand.u32 %v48, 4294901760
    %v709 = vsub.f32 %v48, %v708
    %710 = vmatpush1.msra.mxu0 %v709
    %v711 = vand.u32 %v51, 4294901760
    %v712 = vsub.f32 %v51, %v711
    %713 = vmatprep.subr.mxu0 %v712
    %v714 = vand.u32 %v50, 4294901760
    %v715 = vsub.f32 %v50, %v714
    %716 = vmatpush1.msra.mxu0 %v715
    %v717 = vand.u32 %v53, 4294901760
    %v718 = vsub.f32 %v53, %v717
    %719 = vmatprep.subr.mxu0 %v718
    %v720 = vand.u32 %v52, 4294901760
    %v721 = vsub.f32 %v52, %v720
    %722 = vmatpush1.msra.mxu0 %v721
    %v723 = vand.u32 %v55, 4294901760
    %v724 = vsub.f32 %v55, %v723
    %725 = vmatprep.subr.mxu0 %v724
    %v726 = vand.u32 %v54, 4294901760
    %v727 = vsub.f32 %v54, %v726
    %728 = vmatpush1.msra.mxu0 %v727
    %v729 = vand.u32 %v57, 4294901760
    %v730 = vsub.f32 %v57, %v729
    %731 = vmatprep.subr.mxu0 %v730
    %v732 = vand.u32 %v56, 4294901760
    %v733 = vsub.f32 %v56, %v732
    %734 = vmatpush1.msra.mxu0 %v733
    %v735 = vand.u32 %v59, 4294901760
    %v736 = vsub.f32 %v59, %v735
    %737 = vmatprep.subr.mxu0 %v736
    %v738 = vand.u32 %v58, 4294901760
    %v739 = vsub.f32 %v58, %v738
    %740 = vmatpush1.msra.mxu0 %v739
    %v741 = vand.u32 %v61, 4294901760
    %v742 = vsub.f32 %v61, %v741
    %743 = vmatprep.subr.mxu0 %v742
    %v744 = vand.u32 %v60, 4294901760
    %v745 = vsub.f32 %v60, %v744
    %746 = vmatpush1.msra.mxu0 %v745
    %v747 = vand.u32 %v63, 4294901760
    %v748 = vsub.f32 %v63, %v747
    %749 = vmatprep.subr.mxu0 %v748
    %v750 = vand.u32 %v62, 4294901760
    %v751 = vsub.f32 %v62, %v750
    %752 = vmatpush1.msra.mxu0 %v751
    %v753 = vand.u32 %v65, 4294901760
    %v754 = vsub.f32 %v65, %v753
    %755 = vmatprep.subr.mxu0 %v754
    %v756 = vand.u32 %v64, 4294901760
    %v757 = vsub.f32 %v64, %v756
    %758 = vmatpush1.msra.mxu0 %v757
    %v759 = vand.u32 %v67, 4294901760
    %v760 = vsub.f32 %v67, %v759
    %761 = vmatprep.subr.mxu0 %v760
    %v762 = vand.u32 %v66, 4294901760
    %v763 = vsub.f32 %v66, %v762
    %764 = vmatpush1.msra.mxu0 %v763
    %v765 = vand.u32 %v69, 4294901760
    %v766 = vsub.f32 %v69, %v765
    %767 = vmatprep.subr.mxu0 %v766
    %v768 = vand.u32 %v68, 4294901760
    %v769 = vsub.f32 %v68, %v768
    %770 = vmatpush1.msra.mxu0 %v769
    %v771 = vand.u32 %v71, 4294901760
    %v772 = vsub.f32 %v71, %v771
    %773 = vmatprep.subr.mxu0 %v772
    %v774 = vand.u32 %v70, 4294901760
    %v775 = vsub.f32 %v70, %v774
    %776 = vmatpush1.msra.mxu0 %v775
    %v777 = vand.u32 %v73, 4294901760
    %v778 = vsub.f32 %v73, %v777
    %779 = vmatprep.subr.mxu0 %v778
    %v780 = vand.u32 %v72, 4294901760
    %v781 = vsub.f32 %v72, %v780
    %782 = vmatpush1.msra.mxu0 %v781
    %v783 = vand.u32 %v75, 4294901760
    %v784 = vsub.f32 %v75, %v783
    %785 = vmatprep.subr.mxu0 %v784
    %v786 = vand.u32 %v74, 4294901760
    %v787 = vsub.f32 %v74, %v786
    %788 = vmatpush1.msra.mxu0 %v787
    %v789 = vand.u32 %v77, 4294901760
    %v790 = vsub.f32 %v77, %v789
    %791 = vmatprep.subr.mxu0 %v790
    %v792 = vand.u32 %v76, 4294901760
    %v793 = vsub.f32 %v76, %v792
    %794 = vmatpush1.msra.mxu0 %v793
    %v795 = vand.u32 %v79, 4294901760
    %v796 = vsub.f32 %v79, %v795
    %797 = vmatprep.subr.mxu0 %v796
    %v798 = vand.u32 %v78, 4294901760
    %v799 = vsub.f32 %v78, %v798
    %800 = vmatpush1.msra.mxu0 %v799
    %v801 = vand.u32 %v81, 4294901760
    %v802 = vsub.f32 %v81, %v801
    %803 = vmatprep.subr.mxu0 %v802
    %v804 = vand.u32 %v80, 4294901760
    %v805 = vsub.f32 %v80, %v804
    %806 = vmatpush1.msra.mxu0 %v805
    %v807 = vand.u32 %v83, 4294901760
    %v808 = vsub.f32 %v83, %v807
    %809 = vmatprep.subr.mxu0 %v808
    %v810 = vand.u32 %v82, 4294901760
    %v811 = vsub.f32 %v82, %v810
    %812 = vmatpush1.msra.mxu0 %v811
    %v813 = vand.u32 %v85, 4294901760
    %v814 = vsub.f32 %v85, %v813
    %815 = vmatprep.subr.mxu0 %v814
    %v816 = vand.u32 %v84, 4294901760
    %v817 = vsub.f32 %v84, %v816
    %818 = vmatpush1.msra.mxu0 %v817
    %v819 = vand.u32 %v87, 4294901760
    %v820 = vsub.f32 %v87, %v819
    %821 = vmatprep.subr.mxu0 %v820
    %v822 = vand.u32 %v86, 4294901760
    %v823 = vsub.f32 %v86, %v822
    %824 = vmatpush1.msra.mxu0 %v823
    %v825 = vand.u32 %v89, 4294901760
    %v826 = vsub.f32 %v89, %v825
    %827 = vmatprep.subr.mxu0 %v826
    %v828 = vand.u32 %v88, 4294901760
    %v829 = vsub.f32 %v88, %v828
    %830 = vmatpush1.msra.mxu0 %v829
    %v831 = vand.u32 %v98, 4294901760
    %v832 = vsub.f32 %v98, %v831
    %833 = vmatprep.mubr.f32.mxu0 %v832
    %v834 = vand.u32 %v94, 4294901760
    %v835 = vsub.f32 %v94, %v834
    %836 = vmatmul.mubr.f32.gmra.mrb[0].mxu0 %v835
    %v837 = vpop.f32.mrb[0].mxu0
    %v838 = vadd.f32 %v635, %v837
    %v839 = vpop.f32.mrb[0].mxu0
    %v840 = vadd.f32 %v637, %v839
    %841 = vdwg.mxu0
    %v842 = vand.u32 %v27, 4294901760
    %843 = vmatprep.subr.mxu0 %v842
    %v844 = vand.u32 %v26, 4294901760
    %845 = vmatpush1.msra.mxu0 %v844
    %v846 = vand.u32 %v29, 4294901760
    %847 = vmatprep.subr.mxu0 %v846
    %v848 = vand.u32 %v28, 4294901760
    %849 = vmatpush1.msra.mxu0 %v848
    %v850 = vand.u32 %v31, 4294901760
    %851 = vmatprep.subr.mxu0 %v850
    %v852 = vand.u32 %v30, 4294901760
    %853 = vmatpush1.msra.mxu0 %v852
    %v854 = vand.u32 %v33, 4294901760
    %855 = vmatprep.subr.mxu0 %v854
    %v856 = vand.u32 %v32, 4294901760
    %857 = vmatpush1.msra.mxu0 %v856
    %v858 = vand.u32 %v35, 4294901760
    %859 = vmatprep.subr.mxu0 %v858
    %v860 = vand.u32 %v34, 4294901760
    %861 = vmatpush1.msra.mxu0 %v860
    %v862 = vand.u32 %v37, 4294901760
    %863 = vmatprep.subr.mxu0 %v862
    %v864 = vand.u32 %v36, 4294901760
    %865 = vmatpush1.msra.mxu0 %v864
    %v866 = vand.u32 %v39, 4294901760
    %867 = vmatprep.subr.mxu0 %v866
    %v868 = vand.u32 %v38, 4294901760
    %869 = vmatpush1.msra.mxu0 %v868
    %v870 = vand.u32 %v41, 4294901760
    %871 = vmatprep.subr.mxu0 %v870
    %v872 = vand.u32 %v40, 4294901760
    %873 = vmatpush1.msra.mxu0 %v872
    %v874 = vand.u32 %v43, 4294901760
    %875 = vmatprep.subr.mxu0 %v874
    %v876 = vand.u32 %v42, 4294901760
    %877 = vmatpush1.msra.mxu0 %v876
    %v878 = vand.u32 %v45, 4294901760
    %879 = vmatprep.subr.mxu0 %v878
    %v880 = vand.u32 %v44, 4294901760
    %881 = vmatpush1.msra.mxu0 %v880
    %v882 = vand.u32 %v47, 4294901760
    %883 = vmatprep.subr.mxu0 %v882
    %v884 = vand.u32 %v46, 4294901760
    %885 = vmatpush1.msra.mxu0 %v884
    %v886 = vand.u32 %v49, 4294901760
    %887 = vmatprep.subr.mxu0 %v886
    %v888 = vand.u32 %v48, 4294901760
    %889 = vmatpush1.msra.mxu0 %v888
    %v890 = vand.u32 %v51, 4294901760
    %891 = vmatprep.subr.mxu0 %v890
    %v892 = vand.u32 %v50, 4294901760
    %893 = vmatpush1.msra.mxu0 %v892
    %v894 = vand.u32 %v53, 4294901760
    %895 = vmatprep.subr.mxu0 %v894
    %v896 = vand.u32 %v52, 4294901760
    %897 = vmatpush1.msra.mxu0 %v896
    %v898 = vand.u32 %v55, 4294901760
    %899 = vmatprep.subr.mxu0 %v898
    %v900 = vand.u32 %v54, 4294901760
    %901 = vmatpush1.msra.mxu0 %v900
    %v902 = vand.u32 %v57, 4294901760
    %903 = vmatprep.subr.mxu0 %v902
    %v904 = vand.u32 %v56, 4294901760
    %905 = vmatpush1.msra.mxu0 %v904
    %v906 = vand.u32 %v59, 4294901760
    %907 = vmatprep.subr.mxu0 %v906
    %v908 = vand.u32 %v58, 4294901760
    %909 = vmatpush1.msra.mxu0 %v908
    %v910 = vand.u32 %v61, 4294901760
    %911 = vmatprep.subr.mxu0 %v910
    %v912 = vand.u32 %v60, 4294901760
    %913 = vmatpush1.msra.mxu0 %v912
    %v914 = vand.u32 %v63, 4294901760
    %915 = vmatprep.subr.mxu0 %v914
    %v916 = vand.u32 %v62, 4294901760
    %917 = vmatpush1.msra.mxu0 %v916
    %v918 = vand.u32 %v65, 4294901760
    %919 = vmatprep.subr.mxu0 %v918
    %v920 = vand.u32 %v64, 4294901760
    %921 = vmatpush1.msra.mxu0 %v920
    %v922 = vand.u32 %v67, 4294901760
    %923 = vmatprep.subr.mxu0 %v922
    %v924 = vand.u32 %v66, 4294901760
    %925 = vmatpush1.msra.mxu0 %v924
    %v926 = vand.u32 %v69, 4294901760
    %927 = vmatprep.subr.mxu0 %v926
    %v928 = vand.u32 %v68, 4294901760
    %929 = vmatpush1.msra.mxu0 %v928
    %v930 = vand.u32 %v71, 4294901760
    %931 = vmatprep.subr.mxu0 %v930
    %v932 = vand.u32 %v70, 4294901760
    %933 = vmatpush1.msra.mxu0 %v932
    %v934 = vand.u32 %v73, 4294901760
    %935 = vmatprep.subr.mxu0 %v934
    %v936 = vand.u32 %v72, 4294901760
    %937 = vmatpush1.msra.mxu0 %v936
    %v938 = vand.u32 %v75, 4294901760
    %939 = vmatprep.subr.mxu0 %v938
    %v940 = vand.u32 %v74, 4294901760
    %941 = vmatpush1.msra.mxu0 %v940
    %v942 = vand.u32 %v77, 4294901760
    %943 = vmatprep.subr.mxu0 %v942
    %v944 = vand.u32 %v76, 4294901760
    %945 = vmatpush1.msra.mxu0 %v944
    %v946 = vand.u32 %v79, 4294901760
    %947 = vmatprep.subr.mxu0 %v946
    %v948 = vand.u32 %v78, 4294901760
    %949 = vmatpush1.msra.mxu0 %v948
    %v950 = vand.u32 %v81, 4294901760
    %951 = vmatprep.subr.mxu0 %v950
    %v952 = vand.u32 %v80, 4294901760
    %953 = vmatpush1.msra.mxu0 %v952
    %v954 = vand.u32 %v83, 4294901760
    %955 = vmatprep.subr.mxu0 %v954
    %v956 = vand.u32 %v82, 4294901760
    %957 = vmatpush1.msra.mxu0 %v956
    %v958 = vand.u32 %v85, 4294901760
    %959 = vmatprep.subr.mxu0 %v958
    %v960 = vand.u32 %v84, 4294901760
    %961 = vmatpush1.msra.mxu0 %v960
    %v962 = vand.u32 %v87, 4294901760
    %963 = vmatprep.subr.mxu0 %v962
    %v964 = vand.u32 %v86, 4294901760
    %965 = vmatpush1.msra.mxu0 %v964
    %v966 = vand.u32 %v89, 4294901760
    %967 = vmatprep.subr.mxu0 %v966
    %v968 = vand.u32 %v88, 4294901760
    %969 = vmatpush1.msra.mxu0 %v968
    %v970 = vand.u32 %v98, 4294901760
    %v971 = vsub.f32 %v98, %v970
    %v972 = vand.u32 %v971, 4294901760
    %973 = vmatprep.mubr.f32.mxu0 %v972
    %v974 = vand.u32 %v94, 4294901760
    %v975 = vsub.f32 %v94, %v974
    %v976 = vand.u32 %v975, 4294901760
    %977 = vmatmul.mubr.f32.gmra.mrb[0].mxu0 %v976
    %v978 = vpop.f32.mrb[0].mxu0
    %v979 = vadd.f32 %v838, %v978
    %v980 = vpop.f32.mrb[0].mxu0
    %v981 = vadd.f32 %v840, %v980
    %982 = vdwg.mxu0
    %v983 = vand.u32 %v27, 4294901760
    %v984 = vsub.f32 %v27, %v983
    %v985 = vand.u32 %v984, 4294901760
    %986 = vmatprep.subr.mxu0 %v985
    %v987 = vand.u32 %v26, 4294901760
    %v988 = vsub.f32 %v26, %v987
    %v989 = vand.u32 %v988, 4294901760
    %990 = vmatpush1.msra.mxu0 %v989
    %v991 = vand.u32 %v29, 4294901760
    %v992 = vsub.f32 %v29, %v991
    %v993 = vand.u32 %v992, 4294901760
    %994 = vmatprep.subr.mxu0 %v993
    %v995 = vand.u32 %v28, 4294901760
    %v996 = vsub.f32 %v28, %v995
    %v997 = vand.u32 %v996, 4294901760
    %998 = vmatpush1.msra.mxu0 %v997
    %v999 = vand.u32 %v31, 4294901760
    %v1000 = vsub.f32 %v31, %v999
    %v1001 = vand.u32 %v1000, 4294901760
    %1002 = vmatprep.subr.mxu0 %v1001
    %v1003 = vand.u32 %v30, 4294901760
    %v1004 = vsub.f32 %v30, %v1003
    %v1005 = vand.u32 %v1004, 4294901760
    %1006 = vmatpush1.msra.mxu0 %v1005
    %v1007 = vand.u32 %v33, 4294901760
    %v1008 = vsub.f32 %v33, %v1007
    %v1009 = vand.u32 %v1008, 4294901760
    %1010 = vmatprep.subr.mxu0 %v1009
    %v1011 = vand.u32 %v32, 4294901760
    %v1012 = vsub.f32 %v32, %v1011
    %v1013 = vand.u32 %v1012, 4294901760
    %1014 = vmatpush1.msra.mxu0 %v1013
    %v1015 = vand.u32 %v35, 4294901760
    %v1016 = vsub.f32 %v35, %v1015
    %v1017 = vand.u32 %v1016, 4294901760
    %1018 = vmatprep.subr.mxu0 %v1017
    %v1019 = vand.u32 %v34, 4294901760
    %v1020 = vsub.f32 %v34, %v1019
    %v1021 = vand.u32 %v1020, 4294901760
    %1022 = vmatpush1.msra.mxu0 %v1021
    %v1023 = vand.u32 %v37, 4294901760
    %v1024 = vsub.f32 %v37, %v1023
    %v1025 = vand.u32 %v1024, 4294901760
    %1026 = vmatprep.subr.mxu0 %v1025
    %v1027 = vand.u32 %v36, 4294901760
    %v1028 = vsub.f32 %v36, %v1027
    %v1029 = vand.u32 %v1028, 4294901760
    %1030 = vmatpush1.msra.mxu0 %v1029
    %v1031 = vand.u32 %v39, 4294901760
    %v1032 = vsub.f32 %v39, %v1031
    %v1033 = vand.u32 %v1032, 4294901760
    %1034 = vmatprep.subr.mxu0 %v1033
    %v1035 = vand.u32 %v38, 4294901760
    %v1036 = vsub.f32 %v38, %v1035
    %v1037 = vand.u32 %v1036, 4294901760
    %1038 = vmatpush1.msra.mxu0 %v1037
    %v1039 = vand.u32 %v41, 4294901760
    %v1040 = vsub.f32 %v41, %v1039
    %v1041 = vand.u32 %v1040, 4294901760
    %1042 = vmatprep.subr.mxu0 %v1041
    %v1043 = vand.u32 %v40, 4294901760
    %v1044 = vsub.f32 %v40, %v1043
    %v1045 = vand.u32 %v1044, 4294901760
    %1046 = vmatpush1.msra.mxu0 %v1045
    %v1047 = vand.u32 %v43, 4294901760
    %v1048 = vsub.f32 %v43, %v1047
    %v1049 = vand.u32 %v1048, 4294901760
    %1050 = vmatprep.subr.mxu0 %v1049
    %v1051 = vand.u32 %v42, 4294901760
    %v1052 = vsub.f32 %v42, %v1051
    %v1053 = vand.u32 %v1052, 4294901760
    %1054 = vmatpush1.msra.mxu0 %v1053
    %v1055 = vand.u32 %v45, 4294901760
    %v1056 = vsub.f32 %v45, %v1055
    %v1057 = vand.u32 %v1056, 4294901760
    %1058 = vmatprep.subr.mxu0 %v1057
    %v1059 = vand.u32 %v44, 4294901760
    %v1060 = vsub.f32 %v44, %v1059
    %v1061 = vand.u32 %v1060, 4294901760
    %1062 = vmatpush1.msra.mxu0 %v1061
    %v1063 = vand.u32 %v47, 4294901760
    %v1064 = vsub.f32 %v47, %v1063
    %v1065 = vand.u32 %v1064, 4294901760
    %1066 = vmatprep.subr.mxu0 %v1065
    %v1067 = vand.u32 %v46, 4294901760
    %v1068 = vsub.f32 %v46, %v1067
    %v1069 = vand.u32 %v1068, 4294901760
    %1070 = vmatpush1.msra.mxu0 %v1069
    %v1071 = vand.u32 %v49, 4294901760
    %v1072 = vsub.f32 %v49, %v1071
    %v1073 = vand.u32 %v1072, 4294901760
    %1074 = vmatprep.subr.mxu0 %v1073
    %v1075 = vand.u32 %v48, 4294901760
    %v1076 = vsub.f32 %v48, %v1075
    %v1077 = vand.u32 %v1076, 4294901760
    %1078 = vmatpush1.msra.mxu0 %v1077
    %v1079 = vand.u32 %v51, 4294901760
    %v1080 = vsub.f32 %v51, %v1079
    %v1081 = vand.u32 %v1080, 4294901760
    %1082 = vmatprep.subr.mxu0 %v1081
    %v1083 = vand.u32 %v50, 4294901760
    %v1084 = vsub.f32 %v50, %v1083
    %v1085 = vand.u32 %v1084, 4294901760
    %1086 = vmatpush1.msra.mxu0 %v1085
    %v1087 = vand.u32 %v53, 4294901760
    %v1088 = vsub.f32 %v53, %v1087
    %v1089 = vand.u32 %v1088, 4294901760
    %1090 = vmatprep.subr.mxu0 %v1089
    %v1091 = vand.u32 %v52, 4294901760
    %v1092 = vsub.f32 %v52, %v1091
    %v1093 = vand.u32 %v1092, 4294901760
    %1094 = vmatpush1.msra.mxu0 %v1093
    %v1095 = vand.u32 %v55, 4294901760
    %v1096 = vsub.f32 %v55, %v1095
    %v1097 = vand.u32 %v1096, 4294901760
    %1098 = vmatprep.subr.mxu0 %v1097
    %v1099 = vand.u32 %v54, 4294901760
    %v1100 = vsub.f32 %v54, %v1099
    %v1101 = vand.u32 %v1100, 4294901760
    %1102 = vmatpush1.msra.mxu0 %v1101
    %v1103 = vand.u32 %v57, 4294901760
    %v1104 = vsub.f32 %v57, %v1103
    %v1105 = vand.u32 %v1104, 4294901760
    %1106 = vmatprep.subr.mxu0 %v1105
    %v1107 = vand.u32 %v56, 4294901760
    %v1108 = vsub.f32 %v56, %v1107
    %v1109 = vand.u32 %v1108, 4294901760
    %1110 = vmatpush1.msra.mxu0 %v1109
    %v1111 = vand.u32 %v59, 4294901760
    %v1112 = vsub.f32 %v59, %v1111
    %v1113 = vand.u32 %v1112, 4294901760
    %1114 = vmatprep.subr.mxu0 %v1113
    %v1115 = vand.u32 %v58, 4294901760
    %v1116 = vsub.f32 %v58, %v1115
    %v1117 = vand.u32 %v1116, 4294901760
    %1118 = vmatpush1.msra.mxu0 %v1117
    %v1119 = vand.u32 %v61, 4294901760
    %v1120 = vsub.f32 %v61, %v1119
    %v1121 = vand.u32 %v1120, 4294901760
    %1122 = vmatprep.subr.mxu0 %v1121
    %v1123 = vand.u32 %v60, 4294901760
    %v1124 = vsub.f32 %v60, %v1123
    %v1125 = vand.u32 %v1124, 4294901760
    %1126 = vmatpush1.msra.mxu0 %v1125
    %v1127 = vand.u32 %v63, 4294901760
    %v1128 = vsub.f32 %v63, %v1127
    %v1129 = vand.u32 %v1128, 4294901760
    %1130 = vmatprep.subr.mxu0 %v1129
    %v1131 = vand.u32 %v62, 4294901760
    %v1132 = vsub.f32 %v62, %v1131
    %v1133 = vand.u32 %v1132, 4294901760
    %1134 = vmatpush1.msra.mxu0 %v1133
    %v1135 = vand.u32 %v65, 4294901760
    %v1136 = vsub.f32 %v65, %v1135
    %v1137 = vand.u32 %v1136, 4294901760
    %1138 = vmatprep.subr.mxu0 %v1137
    %v1139 = vand.u32 %v64, 4294901760
    %v1140 = vsub.f32 %v64, %v1139
    %v1141 = vand.u32 %v1140, 4294901760
    %1142 = vmatpush1.msra.mxu0 %v1141
    %v1143 = vand.u32 %v67, 4294901760
    %v1144 = vsub.f32 %v67, %v1143
    %v1145 = vand.u32 %v1144, 4294901760
    %1146 = vmatprep.subr.mxu0 %v1145
    %v1147 = vand.u32 %v66, 4294901760
    %v1148 = vsub.f32 %v66, %v1147
    %v1149 = vand.u32 %v1148, 4294901760
    %1150 = vmatpush1.msra.mxu0 %v1149
    %v1151 = vand.u32 %v69, 4294901760
    %v1152 = vsub.f32 %v69, %v1151
    %v1153 = vand.u32 %v1152, 4294901760
    %1154 = vmatprep.subr.mxu0 %v1153
    %v1155 = vand.u32 %v68, 4294901760
    %v1156 = vsub.f32 %v68, %v1155
    %v1157 = vand.u32 %v1156, 4294901760
    %1158 = vmatpush1.msra.mxu0 %v1157
    %v1159 = vand.u32 %v71, 4294901760
    %v1160 = vsub.f32 %v71, %v1159
    %v1161 = vand.u32 %v1160, 4294901760
    %1162 = vmatprep.subr.mxu0 %v1161
    %v1163 = vand.u32 %v70, 4294901760
    %v1164 = vsub.f32 %v70, %v1163
    %v1165 = vand.u32 %v1164, 4294901760
    %1166 = vmatpush1.msra.mxu0 %v1165
    %v1167 = vand.u32 %v73, 4294901760
    %v1168 = vsub.f32 %v73, %v1167
    %v1169 = vand.u32 %v1168, 4294901760
    %1170 = vmatprep.subr.mxu0 %v1169
    %v1171 = vand.u32 %v72, 4294901760
    %v1172 = vsub.f32 %v72, %v1171
    %v1173 = vand.u32 %v1172, 4294901760
    %1174 = vmatpush1.msra.mxu0 %v1173
    %v1175 = vand.u32 %v75, 4294901760
    %v1176 = vsub.f32 %v75, %v1175
    %v1177 = vand.u32 %v1176, 4294901760
    %1178 = vmatprep.subr.mxu0 %v1177
    %v1179 = vand.u32 %v74, 4294901760
    %v1180 = vsub.f32 %v74, %v1179
    %v1181 = vand.u32 %v1180, 4294901760
    %1182 = vmatpush1.msra.mxu0 %v1181
    %v1183 = vand.u32 %v77, 4294901760
    %v1184 = vsub.f32 %v77, %v1183
    %v1185 = vand.u32 %v1184, 4294901760
    %1186 = vmatprep.subr.mxu0 %v1185
    %v1187 = vand.u32 %v76, 4294901760
    %v1188 = vsub.f32 %v76, %v1187
    %v1189 = vand.u32 %v1188, 4294901760
    %1190 = vmatpush1.msra.mxu0 %v1189
    %v1191 = vand.u32 %v79, 4294901760
    %v1192 = vsub.f32 %v79, %v1191
    %v1193 = vand.u32 %v1192, 4294901760
    %1194 = vmatprep.subr.mxu0 %v1193
    %v1195 = vand.u32 %v78, 4294901760
    %v1196 = vsub.f32 %v78, %v1195
    %v1197 = vand.u32 %v1196, 4294901760
    %1198 = vmatpush1.msra.mxu0 %v1197
    %v1199 = vand.u32 %v81, 4294901760
    %v1200 = vsub.f32 %v81, %v1199
    %v1201 = vand.u32 %v1200, 4294901760
    %1202 = vmatprep.subr.mxu0 %v1201
    %v1203 = vand.u32 %v80, 4294901760
    %v1204 = vsub.f32 %v80, %v1203
    %v1205 = vand.u32 %v1204, 4294901760
    %1206 = vmatpush1.msra.mxu0 %v1205
    %v1207 = vand.u32 %v83, 4294901760
    %v1208 = vsub.f32 %v83, %v1207
    %v1209 = vand.u32 %v1208, 4294901760
    %1210 = vmatprep.subr.mxu0 %v1209
    %v1211 = vand.u32 %v82, 4294901760
    %v1212 = vsub.f32 %v82, %v1211
    %v1213 = vand.u32 %v1212, 4294901760
    %1214 = vmatpush1.msra.mxu0 %v1213
    %v1215 = vand.u32 %v85, 4294901760
    %v1216 = vsub.f32 %v85, %v1215
    %v1217 = vand.u32 %v1216, 4294901760
    %1218 = vmatprep.subr.mxu0 %v1217
    %v1219 = vand.u32 %v84, 4294901760
    %v1220 = vsub.f32 %v84, %v1219
    %v1221 = vand.u32 %v1220, 4294901760
    %1222 = vmatpush1.msra.mxu0 %v1221
    %v1223 = vand.u32 %v87, 4294901760
    %v1224 = vsub.f32 %v87, %v1223
    %v1225 = vand.u32 %v1224, 4294901760
    %1226 = vmatprep.subr.mxu0 %v1225
    %v1227 = vand.u32 %v86, 4294901760
    %v1228 = vsub.f32 %v86, %v1227
    %v1229 = vand.u32 %v1228, 4294901760
    %1230 = vmatpush1.msra.mxu0 %v1229
    %v1231 = vand.u32 %v89, 4294901760
    %v1232 = vsub.f32 %v89, %v1231
    %v1233 = vand.u32 %v1232, 4294901760
    %1234 = vmatprep.subr.mxu0 %v1233
    %v1235 = vand.u32 %v88, 4294901760
    %v1236 = vsub.f32 %v88, %v1235
    %v1237 = vand.u32 %v1236, 4294901760
    %1238 = vmatpush1.msra.mxu0 %v1237
    %v1239 = vand.u32 %v98, 4294901760
    %1240 = vmatprep.mubr.f32.mxu0 %v1239
    %v1241 = vand.u32 %v94, 4294901760
    %1242 = vmatmul.mubr.f32.gmra.mrb[0].mxu0 %v1241
    %v1243 = vpop.f32.mrb[0].mxu0
    %v1244 = vadd.f32 %v979, %v1243
    %v1245 = vpop.f32.mrb[0].mxu0
    %v1246 = vadd.f32 %v981, %v1245
    %1247 = vdwg.mxu0
    %v1248 = vand.u32 %v27, 4294901760
    %1249 = vmatprep.subr.mxu0 %v1248
    %v1250 = vand.u32 %v26, 4294901760
    %1251 = vmatpush1.msra.mxu0 %v1250
    %v1252 = vand.u32 %v29, 4294901760
    %1253 = vmatprep.subr.mxu0 %v1252
    %v1254 = vand.u32 %v28, 4294901760
    %1255 = vmatpush1.msra.mxu0 %v1254
    %v1256 = vand.u32 %v31, 4294901760
    %1257 = vmatprep.subr.mxu0 %v1256
    %v1258 = vand.u32 %v30, 4294901760
    %1259 = vmatpush1.msra.mxu0 %v1258
    %v1260 = vand.u32 %v33, 4294901760
    %1261 = vmatprep.subr.mxu0 %v1260
    %v1262 = vand.u32 %v32, 4294901760
    %1263 = vmatpush1.msra.mxu0 %v1262
    %v1264 = vand.u32 %v35, 4294901760
    %1265 = vmatprep.subr.mxu0 %v1264
    %v1266 = vand.u32 %v34, 4294901760
    %1267 = vmatpush1.msra.mxu0 %v1266
    %v1268 = vand.u32 %v37, 4294901760
    %1269 = vmatprep.subr.mxu0 %v1268
    %v1270 = vand.u32 %v36, 4294901760
    %1271 = vmatpush1.msra.mxu0 %v1270
    %v1272 = vand.u32 %v39, 4294901760
    %1273 = vmatprep.subr.mxu0 %v1272
    %v1274 = vand.u32 %v38, 4294901760
    %1275 = vmatpush1.msra.mxu0 %v1274
    %v1276 = vand.u32 %v41, 4294901760
    %1277 = vmatprep.subr.mxu0 %v1276
    %v1278 = vand.u32 %v40, 4294901760
    %1279 = vmatpush1.msra.mxu0 %v1278
    %v1280 = vand.u32 %v43, 4294901760
    %1281 = vmatprep.subr.mxu0 %v1280
    %v1282 = vand.u32 %v42, 4294901760
    %1283 = vmatpush1.msra.mxu0 %v1282
    %v1284 = vand.u32 %v45, 4294901760
    %1285 = vmatprep.subr.mxu0 %v1284
    %v1286 = vand.u32 %v44, 4294901760
    %1287 = vmatpush1.msra.mxu0 %v1286
    %v1288 = vand.u32 %v47, 4294901760
    %1289 = vmatprep.subr.mxu0 %v1288
    %v1290 = vand.u32 %v46, 4294901760
    %1291 = vmatpush1.msra.mxu0 %v1290
    %v1292 = vand.u32 %v49, 4294901760
    %1293 = vmatprep.subr.mxu0 %v1292
    %v1294 = vand.u32 %v48, 4294901760
    %1295 = vmatpush1.msra.mxu0 %v1294
    %v1296 = vand.u32 %v51, 4294901760
    %1297 = vmatprep.subr.mxu0 %v1296
    %v1298 = vand.u32 %v50, 4294901760
    %1299 = vmatpush1.msra.mxu0 %v1298
    %v1300 = vand.u32 %v53, 4294901760
    %1301 = vmatprep.subr.mxu0 %v1300
    %v1302 = vand.u32 %v52, 4294901760
    %1303 = vmatpush1.msra.mxu0 %v1302
    %v1304 = vand.u32 %v55, 4294901760
    %1305 = vmatprep.subr.mxu0 %v1304
    %v1306 = vand.u32 %v54, 4294901760
    %1307 = vmatpush1.msra.mxu0 %v1306
    %v1308 = vand.u32 %v57, 4294901760
    %1309 = vmatprep.subr.mxu0 %v1308
    %v1310 = vand.u32 %v56, 4294901760
    %1311 = vmatpush1.msra.mxu0 %v1310
    %v1312 = vand.u32 %v59, 4294901760
    %1313 = vmatprep.subr.mxu0 %v1312
    %v1314 = vand.u32 %v58, 4294901760
    %1315 = vmatpush1.msra.mxu0 %v1314
    %v1316 = vand.u32 %v61, 4294901760
    %1317 = vmatprep.subr.mxu0 %v1316
    %v1318 = vand.u32 %v60, 4294901760
    %1319 = vmatpush1.msra.mxu0 %v1318
    %v1320 = vand.u32 %v63, 4294901760
    %1321 = vmatprep.subr.mxu0 %v1320
    %v1322 = vand.u32 %v62, 4294901760
    %1323 = vmatpush1.msra.mxu0 %v1322
    %v1324 = vand.u32 %v65, 4294901760
    %1325 = vmatprep.subr.mxu0 %v1324
    %v1326 = vand.u32 %v64, 4294901760
    %1327 = vmatpush1.msra.mxu0 %v1326
    %v1328 = vand.u32 %v67, 4294901760
    %1329 = vmatprep.subr.mxu0 %v1328
    %v1330 = vand.u32 %v66, 4294901760
    %1331 = vmatpush1.msra.mxu0 %v1330
    %v1332 = vand.u32 %v69, 4294901760
    %1333 = vmatprep.subr.mxu0 %v1332
    %v1334 = vand.u32 %v68, 4294901760
    %1335 = vmatpush1.msra.mxu0 %v1334
    %v1336 = vand.u32 %v71, 4294901760
    %1337 = vmatprep.subr.mxu0 %v1336
    %v1338 = vand.u32 %v70, 4294901760
    %1339 = vmatpush1.msra.mxu0 %v1338
    %v1340 = vand.u32 %v73, 4294901760
    %1341 = vmatprep.subr.mxu0 %v1340
    %v1342 = vand.u32 %v72, 4294901760
    %1343 = vmatpush1.msra.mxu0 %v1342
    %v1344 = vand.u32 %v75, 4294901760
    %1345 = vmatprep.subr.mxu0 %v1344
    %v1346 = vand.u32 %v74, 4294901760
    %1347 = vmatpush1.msra.mxu0 %v1346
    %v1348 = vand.u32 %v77, 4294901760
    %1349 = vmatprep.subr.mxu0 %v1348
    %v1350 = vand.u32 %v76, 4294901760
    %1351 = vmatpush1.msra.mxu0 %v1350
    %v1352 = vand.u32 %v79, 4294901760
    %1353 = vmatprep.subr.mxu0 %v1352
    %v1354 = vand.u32 %v78, 4294901760
    %1355 = vmatpush1.msra.mxu0 %v1354
    %v1356 = vand.u32 %v81, 4294901760
    %1357 = vmatprep.subr.mxu0 %v1356
    %v1358 = vand.u32 %v80, 4294901760
    %1359 = vmatpush1.msra.mxu0 %v1358
    %v1360 = vand.u32 %v83, 4294901760
    %1361 = vmatprep.subr.mxu0 %v1360
    %v1362 = vand.u32 %v82, 4294901760
    %1363 = vmatpush1.msra.mxu0 %v1362
    %v1364 = vand.u32 %v85, 4294901760
    %1365 = vmatprep.subr.mxu0 %v1364
    %v1366 = vand.u32 %v84, 4294901760
    %1367 = vmatpush1.msra.mxu0 %v1366
    %v1368 = vand.u32 %v87, 4294901760
    %1369 = vmatprep.subr.mxu0 %v1368
    %v1370 = vand.u32 %v86, 4294901760
    %1371 = vmatpush1.msra.mxu0 %v1370
    %v1372 = vand.u32 %v89, 4294901760
    %1373 = vmatprep.subr.mxu0 %v1372
    %v1374 = vand.u32 %v88, 4294901760
    %1375 = vmatpush1.msra.mxu0 %v1374
    %v1376 = vand.u32 %v98, 4294901760
    %1377 = vmatprep.mubr.f32.mxu0 %v1376
    %v1378 = vand.u32 %v94, 4294901760
    %1379 = vmatmul.mubr.f32.gmra.mrb[0].mxu0 %v1378
    %v1380 = vpop.f32.mrb[0].mxu0
    %v1381 = vadd.f32 %v1244, %v1380
    %v1382 = vpop.f32.mrb[0].mxu0
    %v1383 = vadd.f32 %v1246, %v1382
    %1384 = vdwg.mxu0
    %v1385 = vand.u32 2147483647, %v1381
    %vm1386 = vcmp.le.f32.partialorder %v1385, 0.7853982
    %vm1387 = vcmp.lt.s32.totalorder %v1381, 0
    %v1388 = vand.u32 %v1381, 2139095040
    %v1389 = vshrl.u32 %v1388, 23
    %v1390 = vsub.s32 %v1389, 127
    %v1391 = vand.u32 2147483647, %v1381
    %v1392 = vand.u32 %v1391, 8388607
    %v1393 = vor.u32 %v1392, 8388608
    %v1394 = vsub.s32 0, %v1393
    %v1395 = vadd.s32 %v1390, 1
    %vm1396 = vcmp.gt.s32.totalorder %v1395, 0
    %v1397 = vsel %vm1396, %v1395, 0
    %v1398 = vshrl.u32 %v1397, 5
    %v1399 = vand.u32 %v1397, 31
    %v1400 = vsub.s32 32, %v1399
    %v1401 = vshrl.u32 683565275, %v1400
    %v1402 = vshll.u32 683565275, %v1399
    %v1403 = vshrl.u32 2475754826, %v1400
    %v1404 = vor.u32 %v1402, %v1403
    %v1405 = vshll.u32 2475754826, %v1399
    %v1406 = vshrl.u32 2131351028, %v1400
    %v1407 = vor.u32 %v1405, %v1406
    %v1408 = vshll.u32 2131351028, %v1399
    %v1409 = vshrl.u32 2102212464, %v1400
    %v1410 = vor.u32 %v1408, %v1409
    %v1411 = vshll.u32 2102212464, %v1399
    %v1412 = vshrl.u32 920167782, %v1400
    %v1413 = vor.u32 %v1411, %v1412
    %v1414 = vshll.u32 920167782, %v1399
    %v1415 = vshrl.u32 1326507024, %v1400
    %v1416 = vor.u32 %v1414, %v1415
    %vm1417 = vcmp.lt.s32.totalorder %v1398, 1
    %vm1418 = vcmp.lt.s32.totalorder %v1398, 2
    %vm1419 = vcmp.lt.s32.totalorder %v1398, 3
    %vm1420 = vcmp.lt.s32.totalorder %v1398, 4
    %v1421 = vsel %vm1417, %v1401, %v1404
    %v1422 = vsel %vm1420, %v1410, 2102212464
    %v1423 = vsel %vm1419, %v1407, %v1422
    %v1424 = vsel %vm1418, %v1421, %v1423
    %v1425 = vsel %vm1417, %v1404, %v1407
    %v1426 = vsel %vm1420, %v1413, 920167782
    %v1427 = vsel %vm1419, %v1410, %v1426
    %v1428 = vsel %vm1418, %v1425, %v1427
    %v1429 = vsel %vm1417, %v1407, %v1410
    %v1430 = vsel %vm1420, %v1416, 1326507024
    %v1431 = vsel %vm1419, %v1413, %v1430
    %v1432 = vsel %vm1418, %v1429, %v1431
    %v1433 = vshll.u32 %v1393, 8
    %v1434 = vmul.u32.u64.compose %v1433, %v1432
    %v1435 = vextract.low.u32 %v1434
    %v1436 = vextract.high.u32 %v1434
    %v1437 = vmul.u32.u64.compose %v1433, %v1428
    %v1438 = vextract.low.u32 %v1437
    %v1439 = vextract.high.u32 %v1437
    %v1440 = vmul.u32 %v1433, %v1424
    %v1441 = vadd.s32 %v1436, %v1438
    %vm1442 = vc.u32 %v1436, %v1438
    %v1443 = vadd.s32 %v1439, 1
    %v1444 = vsel %vm1442, %v1443, %v1439
    %v1445 = vadd.s32 %v1440, %v1444
    %v1446 = vadd.s32 %v1445, 536870912
    %v1447 = vshrl.u32 %v1446, 30
    %v1448 = vshll.u32 %v1447, 30
    %v1449 = vsub.s32 %v1445, %v1448
    %vm1450 = vcmp.lt.s32.totalorder %v1449, 0
    %v1451 = vsub.s32 0, %v1449
    %v1452 = vsel %vm1450, %v1451, %v1449
    %v1453 = vclz %v1452
    %v1454 = vsub.s32 %v1453, 2
    %vm1455 = vcmp.gt.s32.totalorder 0, %v1454
    %v1456 = vsel %vm1455, 0, %v1454
    %v1457 = vsub.s32 32, %v1456
    %v1458 = vshll.u32 %v1449, %v1456
    %v1459 = vshrl.u32 %v1441, %v1457
    %v1460 = vor.u32 %v1458, %v1459
    %v1461 = vsub.s32 4294967266, %v1456
    %v1462 = vadd.s32 %v1461, 127
    %v1463 = vshll.u32 %v1462, 23
    %v1464 = vor.u32 4788187, %v1463
    %v1465 = vand.u32 2147483647, %v1464
    %v1467 = vcvt.s32.f32 %v1460
    %v1468 = vmul.f32 %v1467, %v1465
    %v1469 = vxor.u32 %v1468, 2147483648
    %v1470 = vsel %vm1387, %v1469, %v1468
    %v1471 = vsub.s32 4, %v1447
    %v1472 = vsel %vm1387, %v1471, %v1447
    %v1473 = vsel %vm1386, %v1381, %v1470
    %v1474 = vsel %vm1386, 0, %v1472
    %v1475 = vcosq.f32.pop %v1473
    %v1476 = vsinq.f32.pop %v1473
    %vm1477 = vweird.f32 %v1381
    %v1478 = vand.u32 %v1474, 3
    %vm1479 = vcmp.lt.s32.totalorder %v1478, 2
    %vm1480 = vcmp.eq.s32.totalorder %v1478, 0
    %v1481 = vxor.u32 %v1476, 2147483648
    %v1482 = vsel %vm1480, %v1475, %v1481
    %vm1483 = vcmp.eq.s32.totalorder %v1478, 2
    %v1484 = vxor.u32 %v1475, 2147483648
    %v1485 = vsel %vm1483, %v1484, %v1476
    %v1486 = vsel %vm1479, %v1482, %v1485
    %v1487 = vsel %vm1477, nan, %v1486
    %v1488 = vand.u32 2147483647, %v1381
    %vm1489 = vcmp.le.f32.partialorder %v1488, 0.7853982
    %vm1490 = vcmp.lt.s32.totalorder %v1381, 0
    %v1491 = vand.u32 %v1381, 2139095040
    %v1492 = vshrl.u32 %v1491, 23
    %v1493 = vsub.s32 %v1492, 127
    %v1494 = vand.u32 2147483647, %v1381
    %v1495 = vand.u32 %v1494, 8388607
    %v1496 = vor.u32 %v1495, 8388608
    %v1497 = vsub.s32 0, %v1496
    %v1498 = vadd.s32 %v1493, 1
    %vm1499 = vcmp.gt.s32.totalorder %v1498, 0
    %v1500 = vsel %vm1499, %v1498, 0
    %v1501 = vshrl.u32 %v1500, 5
    %v1502 = vand.u32 %v1500, 31
    %v1503 = vsub.s32 32, %v1502
    %v1504 = vshrl.u32 683565275, %v1503
    %v1505 = vshll.u32 683565275, %v1502
    %v1506 = vshrl.u32 2475754826, %v1503
    %v1507 = vor.u32 %v1505, %v1506
    %v1508 = vshll.u32 2475754826, %v1502
    %v1509 = vshrl.u32 2131351028, %v1503
    %v1510 = vor.u32 %v1508, %v1509
    %v1511 = vshll.u32 2131351028, %v1502
    %v1512 = vshrl.u32 2102212464, %v1503
    %v1513 = vor.u32 %v1511, %v1512
    %v1514 = vshll.u32 2102212464, %v1502
    %v1515 = vshrl.u32 920167782, %v1503
    %v1516 = vor.u32 %v1514, %v1515
    %v1517 = vshll.u32 920167782, %v1502
    %v1518 = vshrl.u32 1326507024, %v1503
    %v1519 = vor.u32 %v1517, %v1518
    %vm1520 = vcmp.lt.s32.totalorder %v1501, 1
    %vm1521 = vcmp.lt.s32.totalorder %v1501, 2
    %vm1522 = vcmp.lt.s32.totalorder %v1501, 3
    %vm1523 = vcmp.lt.s32.totalorder %v1501, 4
    %v1524 = vsel %vm1520, %v1504, %v1507
    %v1525 = vsel %vm1523, %v1513, 2102212464
    %v1526 = vsel %vm1522, %v1510, %v1525
    %v1527 = vsel %vm1521, %v1524, %v1526
    %v1528 = vsel %vm1520, %v1507, %v1510
    %v1529 = vsel %vm1523, %v1516, 920167782
    %v1530 = vsel %vm1522, %v1513, %v1529
    %v1531 = vsel %vm1521, %v1528, %v1530
    %v1532 = vsel %vm1520, %v1510, %v1513
    %v1533 = vsel %vm1523, %v1519, 1326507024
    %v1534 = vsel %vm1522, %v1516, %v1533
    %v1535 = vsel %vm1521, %v1532, %v1534
    %v1536 = vshll.u32 %v1496, 8
    %v1537 = vmul.u32.u64.compose %v1536, %v1535
    %v1538 = vextract.low.u32 %v1537
    %v1539 = vextract.high.u32 %v1537
    %v1540 = vmul.u32.u64.compose %v1536, %v1531
    %v1541 = vextract.low.u32 %v1540
    %v1542 = vextract.high.u32 %v1540
    %v1543 = vmul.u32 %v1536, %v1527
    %v1544 = vadd.s32 %v1539, %v1541
    %vm1545 = vc.u32 %v1539, %v1541
    %v1546 = vadd.s32 %v1542, 1
    %v1547 = vsel %vm1545, %v1546, %v1542
    %v1548 = vadd.s32 %v1543, %v1547
    %v1549 = vadd.s32 %v1548, 536870912
    %v1550 = vshrl.u32 %v1549, 30
    %v1551 = vshll.u32 %v1550, 30
    %v1552 = vsub.s32 %v1548, %v1551
    %vm1553 = vcmp.lt.s32.totalorder %v1552, 0
    %v1554 = vsub.s32 0, %v1552
    %v1555 = vsel %vm1553, %v1554, %v1552
    %v1556 = vclz %v1555
    %v1557 = vsub.s32 %v1556, 2
    %vm1558 = vcmp.gt.s32.totalorder 0, %v1557
    %v1559 = vsel %vm1558, 0, %v1557
    %v1560 = vsub.s32 32, %v1559
    %v1561 = vshll.u32 %v1552, %v1559
    %v1562 = vshrl.u32 %v1544, %v1560
    %v1563 = vor.u32 %v1561, %v1562
    %v1564 = vsub.s32 4294967266, %v1559
    %v1565 = vadd.s32 %v1564, 127
    %v1566 = vshll.u32 %v1565, 23
    %v1567 = vor.u32 4788187, %v1566
    %v1568 = vand.u32 2147483647, %v1567
    %v1570 = vcvt.s32.f32 %v1563
    %v1571 = vmul.f32 %v1570, %v1568
    %v1572 = vxor.u32 %v1571, 2147483648
    %v1573 = vsel %vm1490, %v1572, %v1571
    %v1574 = vsub.s32 4, %v1550
    %v1575 = vsel %vm1490, %v1574, %v1550
    %v1576 = vsel %vm1489, %v1381, %v1573
    %v1577 = vsel %vm1489, 0, %v1575
    %v1578 = vcosq.f32.pop %v1576
    %v1579 = vsinq.f32.pop %v1576
    %vm1580 = vweird.f32 %v1381
    %v1581 = vadd.s32 %v1577, 3
    %v1582 = vand.u32 %v1581, 3
    %vm1583 = vcmp.lt.s32.totalorder %v1582, 2
    %vm1584 = vcmp.eq.s32.totalorder %v1582, 0
    %v1585 = vxor.u32 %v1579, 2147483648
    %v1586 = vsel %vm1584, %v1578, %v1585
    %vm1587 = vcmp.eq.s32.totalorder %v1582, 2
    %v1588 = vxor.u32 %v1578, 2147483648
    %v1589 = vsel %vm1587, %v1588, %v1579
    %v1590 = vsel %vm1583, %v1586, %v1589
    %v1591 = vsel %vm1580, nan, %v1590
    %v1592 = vand.u32 2147483647, %v1383
    %vm1593 = vcmp.le.f32.partialorder %v1592, 0.7853982
    %vm1594 = vcmp.lt.s32.totalorder %v1383, 0
    %v1595 = vand.u32 %v1383, 2139095040
    %v1596 = vshrl.u32 %v1595, 23
    %v1597 = vsub.s32 %v1596, 127
    %v1598 = vand.u32 2147483647, %v1383
    %v1599 = vand.u32 %v1598, 8388607
    %v1600 = vor.u32 %v1599, 8388608
    %v1601 = vsub.s32 0, %v1600
    %v1602 = vadd.s32 %v1597, 1
    %vm1603 = vcmp.gt.s32.totalorder %v1602, 0
    %v1604 = vsel %vm1603, %v1602, 0
    %v1605 = vshrl.u32 %v1604, 5
    %v1606 = vand.u32 %v1604, 31
    %v1607 = vsub.s32 32, %v1606
    %v1608 = vshrl.u32 683565275, %v1607
    %v1609 = vshll.u32 683565275, %v1606
    %v1610 = vshrl.u32 2475754826, %v1607
    %v1611 = vor.u32 %v1609, %v1610
    %v1612 = vshll.u32 2475754826, %v1606
    %v1613 = vshrl.u32 2131351028, %v1607
    %v1614 = vor.u32 %v1612, %v1613
    %v1615 = vshll.u32 2131351028, %v1606
    %v1616 = vshrl.u32 2102212464, %v1607
    %v1617 = vor.u32 %v1615, %v1616
    %v1618 = vshll.u32 2102212464, %v1606
    %v1619 = vshrl.u32 920167782, %v1607
    %v1620 = vor.u32 %v1618, %v1619
    %v1621 = vshll.u32 920167782, %v1606
    %v1622 = vshrl.u32 1326507024, %v1607
    %v1623 = vor.u32 %v1621, %v1622
    %vm1624 = vcmp.lt.s32.totalorder %v1605, 1
    %vm1625 = vcmp.lt.s32.totalorder %v1605, 2
    %vm1626 = vcmp.lt.s32.totalorder %v1605, 3
    %vm1627 = vcmp.lt.s32.totalorder %v1605, 4
    %v1628 = vsel %vm1624, %v1608, %v1611
    %v1629 = vsel %vm1627, %v1617, 2102212464
    %v1630 = vsel %vm1626, %v1614, %v1629
    %v1631 = vsel %vm1625, %v1628, %v1630
    %v1632 = vsel %vm1624, %v1611, %v1614
    %v1633 = vsel %vm1627, %v1620, 920167782
    %v1634 = vsel %vm1626, %v1617, %v1633
    %v1635 = vsel %vm1625, %v1632, %v1634
    %v1636 = vsel %vm1624, %v1614, %v1617
    %v1637 = vsel %vm1627, %v1623, 1326507024
    %v1638 = vsel %vm1626, %v1620, %v1637
    %v1639 = vsel %vm1625, %v1636, %v1638
    %v1640 = vshll.u32 %v1600, 8
    %v1641 = vmul.u32.u64.compose %v1640, %v1639
    %v1642 = vextract.low.u32 %v1641
    %v1643 = vextract.high.u32 %v1641
    %v1644 = vmul.u32.u64.compose %v1640, %v1635
    %v1645 = vextract.low.u32 %v1644
    %v1646 = vextract.high.u32 %v1644
    %v1647 = vmul.u32 %v1640, %v1631
    %v1648 = vadd.s32 %v1643, %v1645
    %vm1649 = vc.u32 %v1643, %v1645
    %v1650 = vadd.s32 %v1646, 1
    %v1651 = vsel %vm1649, %v1650, %v1646
    %v1652 = vadd.s32 %v1647, %v1651
    %v1653 = vadd.s32 %v1652, 536870912
    %v1654 = vshrl.u32 %v1653, 30
    %v1655 = vshll.u32 %v1654, 30
    %v1656 = vsub.s32 %v1652, %v1655
    %vm1657 = vcmp.lt.s32.totalorder %v1656, 0
    %v1658 = vsub.s32 0, %v1656
    %v1659 = vsel %vm1657, %v1658, %v1656
    %v1660 = vclz %v1659
    %v1661 = vsub.s32 %v1660, 2
    %vm1662 = vcmp.gt.s32.totalorder 0, %v1661
    %v1663 = vsel %vm1662, 0, %v1661
    %v1664 = vsub.s32 32, %v1663
    %v1665 = vshll.u32 %v1656, %v1663
    %v1666 = vshrl.u32 %v1648, %v1664
    %v1667 = vor.u32 %v1665, %v1666
    %v1668 = vsub.s32 4294967266, %v1663
    %v1669 = vadd.s32 %v1668, 127
    %v1670 = vshll.u32 %v1669, 23
    %v1671 = vor.u32 4788187, %v1670
    %v1672 = vand.u32 2147483647, %v1671
    %v1674 = vcvt.s32.f32 %v1667
    %v1675 = vmul.f32 %v1674, %v1672
    %v1676 = vxor.u32 %v1675, 2147483648
    %v1677 = vsel %vm1594, %v1676, %v1675
    %v1678 = vsub.s32 4, %v1654
    %v1679 = vsel %vm1594, %v1678, %v1654
    %v1680 = vsel %vm1593, %v1383, %v1677
    %v1681 = vsel %vm1593, 0, %v1679
    %v1682 = vcosq.f32.pop %v1680
    %v1683 = vsinq.f32.pop %v1680
    %vm1684 = vweird.f32 %v1383
    %v1685 = vadd.s32 %v1681, 3
    %v1686 = vand.u32 %v1685, 3
    %vm1687 = vcmp.lt.s32.totalorder %v1686, 2
    %vm1688 = vcmp.eq.s32.totalorder %v1686, 0
    %v1689 = vxor.u32 %v1683, 2147483648
    %v1690 = vsel %vm1688, %v1682, %v1689
    %vm1691 = vcmp.eq.s32.totalorder %v1686, 2
    %v1692 = vxor.u32 %v1682, 2147483648
    %v1693 = vsel %vm1691, %v1692, %v1683
    %v1694 = vsel %vm1687, %v1690, %v1693
    %v1695 = vsel %vm1684, nan, %v1694
    %v1696 = vmul.f32 %v1487, %v1695
    %1697 = vst [vmem:[%s2] sm:$0x1] %v1696
    %v1698 = vmul.f32 %v1591, %v1695
    %s1699 = scalar_lea.vmem %s2, 1
    %1700 = vst [vmem:[%s1699] sm:$0x1] %v1698
    %s1701 = scalar_lea.vmem %s2, 2
    %1702 = vst [vmem:[%s1701] sm:$0x1] %v1487
    // Predicated region
    $region14: #{sphere_forward.1} parent=1 // pred_check
      _
    $region15: #{sphere_forward.1} parent=1 // pred_check_branch
      %1704 = sbr.rel (0) target = $region17
    $region16: #{sphere_forward.1} parent=1 // pred_region
      _
    $region17: #{sphere_forward.1} parent=1 // pred_fallthru
      _
    // Predicated region
    $region18: #{sphere_forward.1} parent=1 // pred_check
      _
    $region19: #{sphere_forward.1} parent=1 // pred_check_branch
      %1706 = sbr.rel (0) target = $region21
    $region20: #{sphere_forward.1} parent=1 // pred_region
      _
    $region21: #{sphere_forward.1} parent=1 // pred_fallthru
      _
    %1707 = vsyncpa [#allocation3], 1

</llo_original>
